<compile_context>
chip_gen: v6e
topology: v6e:2x2x1
jax: 0.10.0
libtpu: 0.0.40
codegen_flags: <defaults>
</compile_context>

<pallas_src>
import math
from functools import partial

import jax
import jax.numpy as jnp
from jax.experimental import pallas as pl
from jax.experimental.pallas import tpu as pltpu


def _erf_f32(x):
    # float32 erf via the Eigen/XLA rational polynomial approximation
    # (max abs err ~1e-7). Used because lax.erf may not have a Mosaic lowering.
    x = jnp.clip(x, -4.0, 4.0)
    x2 = x * x
    a = jnp.float32(-2.72614225801306e-10)
    a = a * x2 + jnp.float32(2.77068142495902e-08)
    a = a * x2 + jnp.float32(-2.10102402082508e-06)
    a = a * x2 + jnp.float32(-5.69250639462346e-05)
    a = a * x2 + jnp.float32(-7.34990630326855e-04)
    a = a * x2 + jnp.float32(-2.95459980854025e-03)
    a = a * x2 + jnp.float32(-1.60960333262415e-02)
    a = a * x
    b = x2 * jnp.float32(-1.45660718464996e-05) + jnp.float32(-2.13374055278905e-04)
    b = b * x2 + jnp.float32(-1.68282697438203e-03)
    b = b * x2 + jnp.float32(-7.37332916720468e-03)
    b = b * x2 + jnp.float32(-1.42647390514189e-02)
    return a / b


def _normalize(v, eps=1e-5):
    # torch.nn.LayerNorm normalization (biased variance, eps inside the sqrt).
    # The affine gain/bias is folded into the next matmul at prep time.
    mu = jnp.mean(v, axis=-1, keepdims=True)
    c = v - mu
    var = jnp.mean(c * c, axis=-1, keepdims=True)
    return c * jax.lax.rsqrt(var + eps)


_WEIGHT_NAMES = ("wq", "bq", "wkv", "bkv", "wproj", "bproj",
                 "wfc", "bfc", "wfp", "bfp")


def _perceiver_kernel(heads, n_layers,
                      x_ref, data_ref,
                      wq, bq, wkv, bkv, wproj, bproj, wfc, bfc, wfp, bfp,
                      out_ref, x_acc, dn_cache):
    layer = pl.program_id(2)

    @pl.when(layer == 0)
    def _():
        # Residual-stream tile loaded once (f32); stays resident across the layer axis.
        x_acc[...] = x_ref[...].astype(jnp.float32)
        # data normalization is layer-independent: compute once per (batch, tile),
        # reuse (as bf16) for every layer's c_kv projection.
        d = data_ref[...].astype(jnp.float32)
        dn_cache[...] = _normalize(d).astype(jnp.bfloat16)

    x = x_acc[...]                                  # (tq, width) f32 residual stream
    width = x.shape[-1]
    attn_ch = width // heads                        # == (2*width)//heads//2 in torch

    # ---- cross-attention branch ----
    # ln_1/ln_2 affine + the 1/sqrt(sqrt(attn_ch)) scale are folded into wq/bq and
    # wkv/bkv (K half) host-side.
    xn = _normalize(x).astype(jnp.bfloat16)
    q = jnp.dot(xn, wq[...], preferred_element_type=jnp.float32) + bq[...]       # (tq, width)
    kv = jnp.dot(dn_cache[...], wkv[...],
                 preferred_element_type=jnp.float32) + bkv[...]                   # (n_data, 2*width)

    # wkv columns were de-interleaved host-side: [all-K | all-V] -> aligned split.
    k = kv[:, :width].astype(jnp.bfloat16)
    v = kv[:, width:].astype(jnp.bfloat16)
    qb = q.astype(jnp.bfloat16)

    # Per-head softmax(QK^T)V, gathered into ONE (tq, width) buffer, then a single
    # full-K output projection.
    head_outs = []
    for h in range(heads):
        sl = slice(h * attn_ch, (h + 1) * attn_ch)
        logits = jax.lax.dot_general(qb[:, sl], k[:, sl], (((1,), (1,)), ((), ())),
                                     preferred_element_type=jnp.float32)          # (tq, n_data)
        logits = logits - jnp.max(logits, axis=-1, keepdims=True)
        p = jnp.exp(logits)
        p = p * pl.reciprocal(jnp.sum(p, axis=-1, keepdims=True), approx=True)
        head_outs.append(jnp.dot(p.astype(jnp.bfloat16), v[:, sl],
                                 preferred_element_type=jnp.float32))              # (tq, attn_ch)
    attn = jnp.concatenate(head_outs, axis=-1)                                     # (tq, width)
    attn = jnp.dot(attn.astype(jnp.bfloat16), wproj[...],
                   preferred_element_type=jnp.float32) + bproj[...]

    x1 = x + attn

    # ---- MLP branch: ln_3 (folded) -> c_fc -> GELU(exact erf) -> c_proj ----
    x1n = _normalize(x1).astype(jnp.bfloat16)
    hid = jnp.dot(x1n, wfc[...], preferred_element_type=jnp.float32) + bfc[...]    # (tq, 4*width)
    hid = 0.5 * hid * (1.0 + _erf_f32(hid * jnp.float32(1.0 / math.sqrt(2.0))))
    mlp = jnp.dot(hid.astype(jnp.bfloat16), wfp[...],
                  preferred_element_type=jnp.float32) + bfp[...]

    x2 = x1 + mlp
    x_acc[...] = x2

    @pl.when(layer == n_layers - 1)
    def _():
        out_ref[...] = x2.astype(out_ref.dtype)


def prepare_params(params, heads):
    """One-time host-side weight transform (NOT per-call activation work):
      * de-interleave c_kv columns from per-head [k_h | v_h] into [all-K | all-V]
      * fold the 1/sqrt(sqrt(attn_ch)) scales into wq/bq and the K half of wkv/bkv
      * fold LayerNorm gains/biases into the following matmul weights/biases
        (ln_1 -> wq/bq, ln_2 -> wkv/bkv, ln_3 -> wfc/bfc)
      * cast matmul weights to bf16 (biases stay f32)
      * stack every tensor along a leading `layers` axis for the fused layer grid.
    """
    width = params[0]["wq"].shape[0]
    attn_ch = width // heads
    scale = 1.0 / math.sqrt(math.sqrt(attn_ch))

    idx = jnp.arange(2 * width).reshape(heads, 2, attn_ch)
    perm = jnp.concatenate([idx[:, 0, :].reshape(-1), idx[:, 1, :].reshape(-1)])
    kscale = jnp.concatenate([jnp.full((width,), scale, jnp.float32),
                              jnp.ones((width,), jnp.float32)])

    prepped = []
    for p in params:
        g1, b1 = p["ln1_g"].reshape(-1), p["ln1_b"].reshape(-1)
        g2, b2 = p["ln2_g"].reshape(-1), p["ln2_b"].reshape(-1)
        g3, b3 = p["ln3_g"].reshape(-1), p["ln3_b"].reshape(-1)

        wq = (g1[:, None] * p["wq"]) * scale
        bq = (b1 @ p["wq"] + p["bq"].reshape(-1)) * scale

        wkv_p = p["wkv"][:, perm]
        bkv_p = p["bkv"].reshape(-1)[perm]
        wkv = (g2[:, None] * wkv_p) * kscale
        bkv = (b2 @ wkv_p + bkv_p) * kscale

        wfc = g3[:, None] * p["wfc"]
        bfc = b3 @ p["wfc"] + p["bfc"].reshape(-1)

        prepped.append({
            "wq": wq.astype(jnp.bfloat16), "bq": bq.reshape(1, -1).astype(jnp.float32),
            "wkv": wkv.astype(jnp.bfloat16), "bkv": bkv.reshape(1, -1).astype(jnp.float32),
            "wproj": p["wproj"].astype(jnp.bfloat16),
            "bproj": p["bproj"].reshape(1, -1).astype(jnp.float32),
            "wfc": wfc.astype(jnp.bfloat16), "bfc": bfc.reshape(1, -1).astype(jnp.float32),
            "wfp": p["wfp"].astype(jnp.bfloat16),
            "bfp": p["bfp"].reshape(1, -1).astype(jnp.float32),
        })
    return {n: jnp.stack([q[n] for q in prepped], axis=0) for n in _WEIGHT_NAMES}


def _pick_q_tile(n_ctx):
    for t in (256, 128, 64, 32, 16, 8):
        if n_ctx % t == 0:
            return t
    return n_ctx  # full extent is always a legal block


def simple_perceiver(x, data, stacked_params, heads, *,
                     q_tile=None, vmem_limit_bytes=48 * 1024 * 1024):
    batch, n_ctx, width = x.shape
    _, n_data, data_width = data.shape
    n_layers = stacked_params["wq"].shape[0]

    if q_tile is None:
        q_tile = _pick_q_tile(n_ctx)
    assert n_ctx % q_tile == 0

    weights = [stacked_params[n] for n in _WEIGHT_NAMES]

    def wspec(arr):
        inner = arr.shape[1:]          # per-layer shape; leading layer dim squeezed
        nd = len(inner)
        return pl.BlockSpec((None,) + inner,
                            lambda b, t, l, _nd=nd: (l,) + (0,) * _nd)

    in_specs = [
        pl.BlockSpec((None, q_tile, width), lambda b, t, l: (b, t, 0)),
        pl.BlockSpec((None, n_data, data_width), lambda b, t, l: (b, 0, 0)),
    ] + [wspec(w) for w in weights]

    grid = (batch, n_ctx // q_tile, n_layers)

    return pl.pallas_call(
        partial(_perceiver_kernel, heads, n_layers),
        out_shape=jax.ShapeDtypeStruct((batch, n_ctx, width), x.dtype),
        grid=grid,
        in_specs=in_specs,
        out_specs=pl.BlockSpec((None, q_tile, width), lambda b, t, l: (b, t, 0)),
        scratch_shapes=[pltpu.VMEM((q_tile, width), jnp.float32),
                        pltpu.VMEM((n_data, data_width), jnp.bfloat16)],
        compiler_params=pltpu.CompilerParams(
            dimension_semantics=("parallel", "parallel", "arbitrary"),
            vmem_limit_bytes=vmem_limit_bytes),
    )(x, data, *weights)


def init_params(key, layers, width, data_width, heads, init_scale=0.25):
    # matches SimplePerceiver.__init__: init_scale *= sqrt(1/width);
    # init_linear -> N(0, std), bias 0. Stored in the PyTorch-equivalent f32 layout.
    std = init_scale * math.sqrt(1.0 / width)
    params = []
    for l in range(layers):
        ks = jax.random.split(jax.random.fold_in(key, l), 5)
        params.append({
            "ln1_g": jnp.ones((1, width), jnp.float32),
            "ln1_b": jnp.zeros((1, width), jnp.float32),
            "ln2_g": jnp.ones((1, data_width), jnp.float32),
            "ln2_b": jnp.zeros((1, data_width), jnp.float32),
            "wq": std * jax.random.normal(ks[0], (width, width), jnp.float32),
            "bq": jnp.zeros((1, width), jnp.float32),
            "wkv": std * jax.random.normal(ks[1], (data_width, 2 * width), jnp.float32),
            "bkv": jnp.zeros((1, 2 * width), jnp.float32),
            "wproj": std * jax.random.normal(ks[2], (width, width), jnp.float32),
            "bproj": jnp.zeros((1, width), jnp.float32),
            "ln3_g": jnp.ones((1, width), jnp.float32),
            "ln3_b": jnp.zeros((1, width), jnp.float32),
            "wfc": std * jax.random.normal(ks[3], (width, 4 * width), jnp.float32),
            "bfc": jnp.zeros((1, 4 * width), jnp.float32),
            "wfp": std * jax.random.normal(ks[4], (4 * width, width), jnp.float32),
            "bfp": jnp.zeros((1, width), jnp.float32),
        })
    return params


def _ref_block(x, data, p, heads):
    # pure-JAX f32 reference mirroring the PyTorch forward exactly
    def ln(v, g, b, eps=1e-5):
        mu = v.mean(-1, keepdims=True)
        var = ((v - mu) ** 2).mean(-1, keepdims=True)
        return (v - mu) / jnp.sqrt(var + eps) * g + b

    bs, n_ctx, width = x.shape
    _, n_data, _ = data.shape
    xn = ln(x, p["ln1_g"][0], p["ln1_b"][0])
    dn = ln(data, p["ln2_g"][0], p["ln2_b"][0])
    q = xn @ p["wq"] + p["bq"][0]
    kv = dn @ p["wkv"] + p["bkv"][0]
    attn_ch = (2 * width) // heads // 2
    scale = 1.0 / math.sqrt(math.sqrt(attn_ch))
    qh = q.reshape(bs, n_ctx, heads, attn_ch)
    kvh = kv.reshape(bs, n_data, heads, 2 * attn_ch)
    k, v = kvh[..., :attn_ch], kvh[..., attn_ch:]
    w = jnp.einsum("bthc,bshc->bhts", qh * scale, k * scale)
    w = jax.nn.softmax(w.astype(jnp.float32), axis=-1)
    o = jnp.einsum("bhts,bshc->bthc", w, v).reshape(bs, n_ctx, width)
    x = x + (o @ p["wproj"] + p["bproj"][0])
    xn3 = ln(x, p["ln3_g"][0], p["ln3_b"][0])
    h = jax.nn.gelu(xn3 @ p["wfc"] + p["bfc"][0], approximate=False)
    return x + (h @ p["wfp"] + p["bfp"][0])


if __name__ == "__main__":
    key = jax.random.PRNGKey(0)
    batch, n_ctx, n_data = 2, 8, 16
    width, data_width, heads, layers = 32, 48, 4, 2

    kx, kd, kp = jax.random.split(key, 3)
    x = jax.random.normal(kx, (batch, n_ctx, width), jnp.float32)
    data = jax.random.normal(kd, (batch, n_data, data_width), jnp.float32)
    params = init_params(kp, layers, width, data_width, heads)

    stacked = prepare_params(params, heads)
    out = simple_perceiver(x, data, stacked, heads)
    out = jax.block_until_ready(out)

    # sanity check against the all-f32 pure-JAX reference
    ref = x
    for p in params:
        ref = _ref_block(ref, data, p, heads)
    assert out.shape == (batch, n_ctx, width)
    err = float(jnp.max(jnp.abs(out - ref)))
    # kernel runs matmuls in bf16 (f32 accumulation) -> looser tolerance vs f32 ref
    assert err < 3e-2, err

    print("KERNEL_OK")
</pallas_src>

<mosaic_0001>
module attributes {stable_mosaic.version = 11 : i64} {
  func.func @_perceiver_kernel(%arg0: i32, %arg1: i32, %arg2: i32, %arg3: memref<1x8x32xf32, #tpu.memory_space<vmem>>, %arg4: memref<1x16x48xf32, #tpu.memory_space<vmem>>, %arg5: memref<1x32x32xbf16, #tpu.memory_space<vmem>>, %arg6: memref<1x1x32xf32, #tpu.memory_space<vmem>>, %arg7: memref<1x48x64xbf16, #tpu.memory_space<vmem>>, %arg8: memref<1x1x64xf32, #tpu.memory_space<vmem>>, %arg9: memref<1x32x32xbf16, #tpu.memory_space<vmem>>, %arg10: memref<1x1x32xf32, #tpu.memory_space<vmem>>, %arg11: memref<1x32x128xbf16, #tpu.memory_space<vmem>>, %arg12: memref<1x1x128xf32, #tpu.memory_space<vmem>>, %arg13: memref<1x128x32xbf16, #tpu.memory_space<vmem>>, %arg14: memref<1x1x32xf32, #tpu.memory_space<vmem>>, %arg15: memref<1x8x32xf32, #tpu.memory_space<vmem>>, %arg16: memref<8x32xf32, #tpu.memory_space<vmem>>, %arg17: memref<16x48xbf16, #tpu.memory_space<vmem>>) attributes {dimension_semantics = [#tpu.dimension_semantics<parallel>, #tpu.dimension_semantics<parallel>, #tpu.dimension_semantics<arbitrary>], iteration_bounds = array<i64: 2, 1, 2>, scalar_prefetch = 0 : i64, scratch_operands = 2 : i64, tpu.core_type = #tpu.core_type<tc>, window_params = [{transform_indices = @transform_0, window_bounds = array<i64: 1, 8, 32>}, {transform_indices = @transform_1, window_bounds = array<i64: 1, 16, 48>}, {transform_indices = @transform_2, window_bounds = array<i64: 1, 32, 32>}, {transform_indices = @transform_3, window_bounds = array<i64: 1, 1, 32>}, {transform_indices = @transform_4, window_bounds = array<i64: 1, 48, 64>}, {transform_indices = @transform_5, window_bounds = array<i64: 1, 1, 64>}, {transform_indices = @transform_6, window_bounds = array<i64: 1, 32, 32>}, {transform_indices = @transform_7, window_bounds = array<i64: 1, 1, 32>}, {transform_indices = @transform_8, window_bounds = array<i64: 1, 32, 128>}, {transform_indices = @transform_9, window_bounds = array<i64: 1, 1, 128>}, {transform_indices = @transform_10, window_bounds = array<i64: 1, 128, 32>}, {transform_indices = @transform_11, window_bounds = array<i64: 1, 1, 32>}, {transform_indices = @transform_12, window_bounds = array<i64: 1, 8, 32>}]} {
    %c0_i32 = arith.constant 0 : i32
    %0 = arith.cmpi eq, %arg2, %c0_i32 : i32
    %1 = arith.extui %0 : i1 to i32
    %c0_i32_0 = arith.constant 0 : i32
    %2 = arith.cmpi ne, %1, %c0_i32_0 : i32
    scf.if %2 {
      %c0_84 = arith.constant 0 : index
      %c0_85 = arith.constant 0 : index
      %c0_86 = arith.constant 0 : index
      %198 = vector.load %arg3[%c0_84, %c0_85, %c0_86] : memref<1x8x32xf32, #tpu.memory_space<vmem>>, vector<1x8x32xf32>
      %199 = vector.shape_cast %198 : vector<1x8x32xf32> to vector<8x32xf32>
      %c0_87 = arith.constant 0 : index
      %c0_88 = arith.constant 0 : index
      %200 = vector.load %arg16[%c0_87, %c0_88] : memref<8x32xf32, #tpu.memory_space<vmem>>, vector<8x32xf32>
      tpu.vector_store %arg16[%c0_87, %c0_88], %199 {strides = array<i32>} : memref<8x32xf32, #tpu.memory_space<vmem>>, vector<8x32xf32>,
      %c0_89 = arith.constant 0 : index
      %c0_90 = arith.constant 0 : index
      %c0_91 = arith.constant 0 : index
      %201 = vector.load %arg4[%c0_89, %c0_90, %c0_91] : memref<1x16x48xf32, #tpu.memory_space<vmem>>, vector<1x16x48xf32>
      %202 = vector.shape_cast %201 : vector<1x16x48xf32> to vector<16x48xf32>
      %cst_92 = arith.constant dense<0.000000e+00> : vector<16xf32>
      %203 = vector.multi_reduction <add>, %202, %cst_92 [1] : vector<16x48xf32> to vector<16xf32>
      %204 = vector.shape_cast %203 : vector<16xf32> to vector<16x1xf32>
      %cst_93 = arith.constant 4.800000e+01 : f32
      %205 = vector.broadcast %cst_93 : f32 to vector<16x1xf32>
      %206 = arith.divf %204, %205 : vector<16x1xf32>
      %207 = vector.broadcast %206 : vector<16x1xf32> to vector<16x48xf32>
      %208 = arith.subf %202, %207 : vector<16x48xf32>
      %209 = arith.mulf %208, %208 : vector<16x48xf32>
      %cst_94 = arith.constant dense<0.000000e+00> : vector<16xf32>
      %210 = vector.multi_reduction <add>, %209, %cst_94 [1] : vector<16x48xf32> to vector<16xf32>
      %211 = vector.shape_cast %210 : vector<16xf32> to vector<16x1xf32>
      %cst_95 = arith.constant 4.800000e+01 : f32
      %212 = vector.broadcast %cst_95 : f32 to vector<16x1xf32>
      %213 = arith.divf %211, %212 : vector<16x1xf32>
      %cst_96 = arith.constant 9.99999974E-6 : f32
      %214 = vector.broadcast %cst_96 : f32 to vector<16x1xf32>
      %215 = arith.addf %213, %214 : vector<16x1xf32>
      %216 = math.rsqrt %215 : vector<16x1xf32>
      %217 = vector.broadcast %216 : vector<16x1xf32> to vector<16x48xf32>
      %218 = arith.mulf %208, %217 : vector<16x48xf32>
      %219 = arith.truncf %218 : vector<16x48xf32> to vector<16x48xbf16>
      %c0_97 = arith.constant 0 : index
      %c0_98 = arith.constant 0 : index
      %220 = vector.load %arg17[%c0_97, %c0_98] : memref<16x48xbf16, #tpu.memory_space<vmem>>, vector<16x48xbf16>
      tpu.vector_store %arg17[%c0_97, %c0_98], %219 {strides = array<i32>} : memref<16x48xbf16, #tpu.memory_space<vmem>>, vector<16x48xbf16>,
    } else {
    }
    %c0 = arith.constant 0 : index
    %c0_1 = arith.constant 0 : index
    %3 = vector.load %arg16[%c0, %c0_1] : memref<8x32xf32, #tpu.memory_space<vmem>>, vector<8x32xf32>
    %cst = arith.constant dense<0.000000e+00> : vector<8xf32>
    %4 = vector.multi_reduction <add>, %3, %cst [1] : vector<8x32xf32> to vector<8xf32>
    %5 = vector.shape_cast %4 : vector<8xf32> to vector<8x1xf32>
    %cst_2 = arith.constant 3.200000e+01 : f32
    %6 = vector.broadcast %cst_2 : f32 to vector<8x1xf32>
    %7 = arith.divf %5, %6 : vector<8x1xf32>
    %8 = vector.broadcast %7 : vector<8x1xf32> to vector<8x32xf32>
    %9 = arith.subf %3, %8 : vector<8x32xf32>
    %10 = arith.mulf %9, %9 : vector<8x32xf32>
    %cst_3 = arith.constant dense<0.000000e+00> : vector<8xf32>
    %11 = vector.multi_reduction <add>, %10, %cst_3 [1] : vector<8x32xf32> to vector<8xf32>
    %12 = vector.shape_cast %11 : vector<8xf32> to vector<8x1xf32>
    %cst_4 = arith.constant 3.200000e+01 : f32
    %13 = vector.broadcast %cst_4 : f32 to vector<8x1xf32>
    %14 = arith.divf %12, %13 : vector<8x1xf32>
    %cst_5 = arith.constant 9.99999974E-6 : f32
    %15 = vector.broadcast %cst_5 : f32 to vector<8x1xf32>
    %16 = arith.addf %14, %15 : vector<8x1xf32>
    %17 = math.rsqrt %16 : vector<8x1xf32>
    %18 = vector.broadcast %17 : vector<8x1xf32> to vector<8x32xf32>
    %19 = arith.mulf %9, %18 : vector<8x32xf32>
    %20 = arith.truncf %19 : vector<8x32xf32> to vector<8x32xbf16>
    %c0_6 = arith.constant 0 : index
    %c0_7 = arith.constant 0 : index
    %c0_8 = arith.constant 0 : index
    %21 = vector.load %arg5[%c0_6, %c0_7, %c0_8] : memref<1x32x32xbf16, #tpu.memory_space<vmem>>, vector<1x32x32xbf16>
    %22 = vector.shape_cast %21 : vector<1x32x32xbf16> to vector<32x32xbf16>
    %cst_9 = arith.constant dense<0.000000e+00> : vector<8x32xf32>
    %23 = tpu.matmul %20, %22, %cst_9 {dimension_numbers = #tpu.dot_dimension_numbers<[1], [0], [0], [1], [0, 0, 1, 1], [], []>} : vector<8x32xbf16>, vector<32x32xbf16>, vector<8x32xf32> -> vector<8x32xf32>
    %c0_10 = arith.constant 0 : index
    %c0_11 = arith.constant 0 : index
    %c0_12 = arith.constant 0 : index
    %24 = vector.load %arg6[%c0_10, %c0_11, %c0_12] : memref<1x1x32xf32, #tpu.memory_space<vmem>>, vector<1x1x32xf32>
    %25 = vector.shape_cast %24 : vector<1x1x32xf32> to vector<1x32xf32>
    %26 = vector.broadcast %25 : vector<1x32xf32> to vector<8x32xf32>
    %27 = arith.addf %23, %26 : vector<8x32xf32>
    %c0_13 = arith.constant 0 : index
    %c0_14 = arith.constant 0 : index
    %28 = vector.load %arg17[%c0_13, %c0_14] : memref<16x48xbf16, #tpu.memory_space<vmem>>, vector<16x48xbf16>
    %c0_15 = arith.constant 0 : index
    %c0_16 = arith.constant 0 : index
    %c0_17 = arith.constant 0 : index
    %29 = vector.load %arg7[%c0_15, %c0_16, %c0_17] : memref<1x48x64xbf16, #tpu.memory_space<vmem>>, vector<1x48x64xbf16>
    %30 = vector.shape_cast %29 : vector<1x48x64xbf16> to vector<48x64xbf16>
    %cst_18 = arith.constant dense<0.000000e+00> : vector<16x64xf32>
    %31 = tpu.matmul %28, %30, %cst_18 {dimension_numbers = #tpu.dot_dimension_numbers<[1], [0], [0], [1], [0, 0, 1, 1], [], []>} : vector<16x48xbf16>, vector<48x64xbf16>, vector<16x64xf32> -> vector<16x64xf32>
    %c0_19 = arith.constant 0 : index
    %c0_20 = arith.constant 0 : index
    %c0_21 = arith.constant 0 : index
    %32 = vector.load %arg8[%c0_19, %c0_20, %c0_21] : memref<1x1x64xf32, #tpu.memory_space<vmem>>, vector<1x1x64xf32>
    %33 = vector.shape_cast %32 : vector<1x1x64xf32> to vector<1x64xf32>
    %34 = vector.broadcast %33 : vector<1x64xf32> to vector<16x64xf32>
    %35 = arith.addf %31, %34 : vector<16x64xf32>
    %36 = vector.extract_strided_slice %35 {offsets = [0, 0], sizes = [16, 32], strides = [1, 1]} : vector<16x64xf32> to vector<16x32xf32>
    %37 = arith.truncf %36 : vector<16x32xf32> to vector<16x32xbf16>
    %38 = vector.extract_strided_slice %35 {offsets = [0, 32], sizes = [16, 32], strides = [1, 1]} : vector<16x64xf32> to vector<16x32xf32>
    %39 = arith.truncf %38 : vector<16x32xf32> to vector<16x32xbf16>
    %40 = arith.truncf %27 : vector<8x32xf32> to vector<8x32xbf16>
    %41 = vector.extract_strided_slice %40 {offsets = [0, 0], sizes = [8, 8], strides = [1, 1]} : vector<8x32xbf16> to vector<8x8xbf16>
    %42 = vector.extract_strided_slice %37 {offsets = [0, 0], sizes = [16, 8], strides = [1, 1]} : vector<16x32xbf16> to vector<16x8xbf16>
    %cst_22 = arith.constant dense<0.000000e+00> : vector<8x16xf32>
    %43 = tpu.matmul %41, %42, %cst_22 {dimension_numbers = #tpu.dot_dimension_numbers<[1], [1], [0], [0], [0, 0, 1, 0], [], []>} : vector<8x8xbf16>, vector<16x8xbf16>, vector<8x16xf32> -> vector<8x16xf32>
    %cst_23 = arith.constant dense<0xFF800000> : vector<8xf32>
    %44 = vector.multi_reduction <maximumf>, %43, %cst_23 [1] : vector<8x16xf32> to vector<8xf32>
    %45 = vector.shape_cast %44 : vector<8xf32> to vector<8x1xf32>
    %46 = vector.broadcast %45 : vector<8x1xf32> to vector<8x16xf32>
    %47 = arith.subf %43, %46 : vector<8x16xf32>
    %48 = math.exp %47 : vector<8x16xf32>
    %cst_24 = arith.constant dense<0.000000e+00> : vector<8xf32>
    %49 = vector.multi_reduction <add>, %48, %cst_24 [1] : vector<8x16xf32> to vector<8xf32>
    %50 = vector.shape_cast %49 : vector<8xf32> to vector<8x1xf32>
    %51 = tpu.reciprocal %50 {approx = true} : vector<8x1xf32> -> vector<8x1xf32>
    %52 = vector.broadcast %51 : vector<8x1xf32> to vector<8x16xf32>
    %53 = arith.mulf %48, %52 : vector<8x16xf32>
    %54 = arith.truncf %53 : vector<8x16xf32> to vector<8x16xbf16>
    %55 = vector.extract_strided_slice %39 {offsets = [0, 0], sizes = [16, 8], strides = [1, 1]} : vector<16x32xbf16> to vector<16x8xbf16>
    %cst_25 = arith.constant dense<0.000000e+00> : vector<8x8xf32>
    %56 = tpu.matmul %54, %55, %cst_25 {dimension_numbers = #tpu.dot_dimension_numbers<[1], [0], [0], [1], [0, 0, 1, 1], [], []>} : vector<8x16xbf16>, vector<16x8xbf16>, vector<8x8xf32> -> vector<8x8xf32>
    %57 = vector.extract_strided_slice %40 {offsets = [0, 8], sizes = [8, 8], strides = [1, 1]} : vector<8x32xbf16> to vector<8x8xbf16>
    %58 = vector.extract_strided_slice %37 {offsets = [0, 8], sizes = [16, 8], strides = [1, 1]} : vector<16x32xbf16> to vector<16x8xbf16>
    %cst_26 = arith.constant dense<0.000000e+00> : vector<8x16xf32>
    %59 = tpu.matmul %57, %58, %cst_26 {dimension_numbers = #tpu.dot_dimension_numbers<[1], [1], [0], [0], [0, 0, 1, 0], [], []>} : vector<8x8xbf16>, vector<16x8xbf16>, vector<8x16xf32> -> vector<8x16xf32>
    %cst_27 = arith.constant dense<0xFF800000> : vector<8xf32>
    %60 = vector.multi_reduction <maximumf>, %59, %cst_27 [1] : vector<8x16xf32> to vector<8xf32>
    %61 = vector.shape_cast %60 : vector<8xf32> to vector<8x1xf32>
    %62 = vector.broadcast %61 : vector<8x1xf32> to vector<8x16xf32>
    %63 = arith.subf %59, %62 : vector<8x16xf32>
    %64 = math.exp %63 : vector<8x16xf32>
    %cst_28 = arith.constant dense<0.000000e+00> : vector<8xf32>
    %65 = vector.multi_reduction <add>, %64, %cst_28 [1] : vector<8x16xf32> to vector<8xf32>
    %66 = vector.shape_cast %65 : vector<8xf32> to vector<8x1xf32>
    %67 = tpu.reciprocal %66 {approx = true} : vector<8x1xf32> -> vector<8x1xf32>
    %68 = vector.broadcast %67 : vector<8x1xf32> to vector<8x16xf32>
    %69 = arith.mulf %64, %68 : vector<8x16xf32>
    %70 = arith.truncf %69 : vector<8x16xf32> to vector<8x16xbf16>
    %71 = vector.extract_strided_slice %39 {offsets = [0, 8], sizes = [16, 8], strides = [1, 1]} : vector<16x32xbf16> to vector<16x8xbf16>
    %cst_29 = arith.constant dense<0.000000e+00> : vector<8x8xf32>
    %72 = tpu.matmul %70, %71, %cst_29 {dimension_numbers = #tpu.dot_dimension_numbers<[1], [0], [0], [1], [0, 0, 1, 1], [], []>} : vector<8x16xbf16>, vector<16x8xbf16>, vector<8x8xf32> -> vector<8x8xf32>
    %73 = vector.extract_strided_slice %40 {offsets = [0, 16], sizes = [8, 8], strides = [1, 1]} : vector<8x32xbf16> to vector<8x8xbf16>
    %74 = vector.extract_strided_slice %37 {offsets = [0, 16], sizes = [16, 8], strides = [1, 1]} : vector<16x32xbf16> to vector<16x8xbf16>
    %cst_30 = arith.constant dense<0.000000e+00> : vector<8x16xf32>
    %75 = tpu.matmul %73, %74, %cst_30 {dimension_numbers = #tpu.dot_dimension_numbers<[1], [1], [0], [0], [0, 0, 1, 0], [], []>} : vector<8x8xbf16>, vector<16x8xbf16>, vector<8x16xf32> -> vector<8x16xf32>
    %cst_31 = arith.constant dense<0xFF800000> : vector<8xf32>
    %76 = vector.multi_reduction <maximumf>, %75, %cst_31 [1] : vector<8x16xf32> to vector<8xf32>
    %77 = vector.shape_cast %76 : vector<8xf32> to vector<8x1xf32>
    %78 = vector.broadcast %77 : vector<8x1xf32> to vector<8x16xf32>
    %79 = arith.subf %75, %78 : vector<8x16xf32>
    %80 = math.exp %79 : vector<8x16xf32>
    %cst_32 = arith.constant dense<0.000000e+00> : vector<8xf32>
    %81 = vector.multi_reduction <add>, %80, %cst_32 [1] : vector<8x16xf32> to vector<8xf32>
    %82 = vector.shape_cast %81 : vector<8xf32> to vector<8x1xf32>
    %83 = tpu.reciprocal %82 {approx = true} : vector<8x1xf32> -> vector<8x1xf32>
    %84 = vector.broadcast %83 : vector<8x1xf32> to vector<8x16xf32>
    %85 = arith.mulf %80, %84 : vector<8x16xf32>
    %86 = arith.truncf %85 : vector<8x16xf32> to vector<8x16xbf16>
    %87 = vector.extract_strided_slice %39 {offsets = [0, 16], sizes = [16, 8], strides = [1, 1]} : vector<16x32xbf16> to vector<16x8xbf16>
    %cst_33 = arith.constant dense<0.000000e+00> : vector<8x8xf32>
    %88 = tpu.matmul %86, %87, %cst_33 {dimension_numbers = #tpu.dot_dimension_numbers<[1], [0], [0], [1], [0, 0, 1, 1], [], []>} : vector<8x16xbf16>, vector<16x8xbf16>, vector<8x8xf32> -> vector<8x8xf32>
    %89 = vector.extract_strided_slice %40 {offsets = [0, 24], sizes = [8, 8], strides = [1, 1]} : vector<8x32xbf16> to vector<8x8xbf16>
    %90 = vector.extract_strided_slice %37 {offsets = [0, 24], sizes = [16, 8], strides = [1, 1]} : vector<16x32xbf16> to vector<16x8xbf16>
    %cst_34 = arith.constant dense<0.000000e+00> : vector<8x16xf32>
    %91 = tpu.matmul %89, %90, %cst_34 {dimension_numbers = #tpu.dot_dimension_numbers<[1], [1], [0], [0], [0, 0, 1, 0], [], []>} : vector<8x8xbf16>, vector<16x8xbf16>, vector<8x16xf32> -> vector<8x16xf32>
    %cst_35 = arith.constant dense<0xFF800000> : vector<8xf32>
    %92 = vector.multi_reduction <maximumf>, %91, %cst_35 [1] : vector<8x16xf32> to vector<8xf32>
    %93 = vector.shape_cast %92 : vector<8xf32> to vector<8x1xf32>
    %94 = vector.broadcast %93 : vector<8x1xf32> to vector<8x16xf32>
    %95 = arith.subf %91, %94 : vector<8x16xf32>
    %96 = math.exp %95 : vector<8x16xf32>
    %cst_36 = arith.constant dense<0.000000e+00> : vector<8xf32>
    %97 = vector.multi_reduction <add>, %96, %cst_36 [1] : vector<8x16xf32> to vector<8xf32>
    %98 = vector.shape_cast %97 : vector<8xf32> to vector<8x1xf32>
    %99 = tpu.reciprocal %98 {approx = true} : vector<8x1xf32> -> vector<8x1xf32>
    %100 = vector.broadcast %99 : vector<8x1xf32> to vector<8x16xf32>
    %101 = arith.mulf %96, %100 : vector<8x16xf32>
    %102 = arith.truncf %101 : vector<8x16xf32> to vector<8x16xbf16>
    %103 = vector.extract_strided_slice %39 {offsets = [0, 24], sizes = [16, 8], strides = [1, 1]} : vector<16x32xbf16> to vector<16x8xbf16>
    %cst_37 = arith.constant dense<0.000000e+00> : vector<8x8xf32>
    %104 = tpu.matmul %102, %103, %cst_37 {dimension_numbers = #tpu.dot_dimension_numbers<[1], [0], [0], [1], [0, 0, 1, 1], [], []>} : vector<8x16xbf16>, vector<16x8xbf16>, vector<8x8xf32> -> vector<8x8xf32>
    %105 = tpu.concatenate %56, %72, %88, %104 in 1 : vector<8x8xf32>, vector<8x8xf32>, vector<8x8xf32>, vector<8x8xf32> -> vector<8x32xf32>
    %106 = arith.truncf %105 : vector<8x32xf32> to vector<8x32xbf16>
    %c0_38 = arith.constant 0 : index
    %c0_39 = arith.constant 0 : index
    %c0_40 = arith.constant 0 : index
    %107 = vector.load %arg9[%c0_38, %c0_39, %c0_40] : memref<1x32x32xbf16, #tpu.memory_space<vmem>>, vector<1x32x32xbf16>
    %108 = vector.shape_cast %107 : vector<1x32x32xbf16> to vector<32x32xbf16>
    %cst_41 = arith.constant dense<0.000000e+00> : vector<8x32xf32>
    %109 = tpu.matmul %106, %108, %cst_41 {dimension_numbers = #tpu.dot_dimension_numbers<[1], [0], [0], [1], [0, 0, 1, 1], [], []>} : vector<8x32xbf16>, vector<32x32xbf16>, vector<8x32xf32> -> vector<8x32xf32>
    %c0_42 = arith.constant 0 : index
    %c0_43 = arith.constant 0 : index
    %c0_44 = arith.constant 0 : index
    %110 = vector.load %arg10[%c0_42, %c0_43, %c0_44] : memref<1x1x32xf32, #tpu.memory_space<vmem>>, vector<1x1x32xf32>
    %111 = vector.shape_cast %110 : vector<1x1x32xf32> to vector<1x32xf32>
    %112 = vector.broadcast %111 : vector<1x32xf32> to vector<8x32xf32>
    %113 = arith.addf %109, %112 : vector<8x32xf32>
    %114 = arith.addf %3, %113 : vector<8x32xf32>
    %cst_45 = arith.constant dense<0.000000e+00> : vector<8xf32>
    %115 = vector.multi_reduction <add>, %114, %cst_45 [1] : vector<8x32xf32> to vector<8xf32>
    %116 = vector.shape_cast %115 : vector<8xf32> to vector<8x1xf32>
    %cst_46 = arith.constant 3.200000e+01 : f32
    %117 = vector.broadcast %cst_46 : f32 to vector<8x1xf32>
    %118 = arith.divf %116, %117 : vector<8x1xf32>
    %119 = vector.broadcast %118 : vector<8x1xf32> to vector<8x32xf32>
    %120 = arith.subf %114, %119 : vector<8x32xf32>
    %121 = arith.mulf %120, %120 : vector<8x32xf32>
    %cst_47 = arith.constant dense<0.000000e+00> : vector<8xf32>
    %122 = vector.multi_reduction <add>, %121, %cst_47 [1] : vector<8x32xf32> to vector<8xf32>
    %123 = vector.shape_cast %122 : vector<8xf32> to vector<8x1xf32>
    %cst_48 = arith.constant 3.200000e+01 : f32
    %124 = vector.broadcast %cst_48 : f32 to vector<8x1xf32>
    %125 = arith.divf %123, %124 : vector<8x1xf32>
    %cst_49 = arith.constant 9.99999974E-6 : f32
    %126 = vector.broadcast %cst_49 : f32 to vector<8x1xf32>
    %127 = arith.addf %125, %126 : vector<8x1xf32>
    %128 = math.rsqrt %127 : vector<8x1xf32>
    %129 = vector.broadcast %128 : vector<8x1xf32> to vector<8x32xf32>
    %130 = arith.mulf %120, %129 : vector<8x32xf32>
    %131 = arith.truncf %130 : vector<8x32xf32> to vector<8x32xbf16>
    %c0_50 = arith.constant 0 : index
    %c0_51 = arith.constant 0 : index
    %c0_52 = arith.constant 0 : index
    %132 = vector.load %arg11[%c0_50, %c0_51, %c0_52] : memref<1x32x128xbf16, #tpu.memory_space<vmem>>, vector<1x32x128xbf16>
    %133 = vector.shape_cast %132 : vector<1x32x128xbf16> to vector<32x128xbf16>
    %cst_53 = arith.constant dense<0.000000e+00> : vector<8x128xf32>
    %134 = tpu.matmul %131, %133, %cst_53 {dimension_numbers = #tpu.dot_dimension_numbers<[1], [0], [0], [1], [0, 0, 1, 1], [], []>} : vector<8x32xbf16>, vector<32x128xbf16>, vector<8x128xf32> -> vector<8x128xf32>
    %c0_54 = arith.constant 0 : index
    %c0_55 = arith.constant 0 : index
    %c0_56 = arith.constant 0 : index
    %135 = vector.load %arg12[%c0_54, %c0_55, %c0_56] : memref<1x1x128xf32, #tpu.memory_space<vmem>>, vector<1x1x128xf32>
    %136 = vector.shape_cast %135 : vector<1x1x128xf32> to vector<1x128xf32>
    %137 = vector.broadcast %136 : vector<1x128xf32> to vector<8x128xf32>
    %138 = arith.addf %134, %137 : vector<8x128xf32>
    %cst_57 = arith.constant 5.000000e-01 : f32
    %139 = vector.broadcast %cst_57 : f32 to vector<8x128xf32>
    %140 = arith.mulf %139, %138 : vector<8x128xf32>
    %cst_58 = arith.constant 0.707106769 : f32
    %141 = vector.broadcast %cst_58 : f32 to vector<8x128xf32>
    %142 = arith.mulf %138, %141 : vector<8x128xf32>
    %cst_59 = arith.constant -4.000000e+00 : f32
    %cst_60 = arith.constant 4.000000e+00 : f32
    %143 = vector.broadcast %cst_59 : f32 to vector<8x128xf32>
    %144 = arith.maximumf %143, %142 : vector<8x128xf32>
    %145 = vector.broadcast %cst_60 : f32 to vector<8x128xf32>
    %146 = arith.minimumf %145, %144 : vector<8x128xf32>
    %147 = arith.mulf %146, %146 : vector<8x128xf32>
    %cst_61 = arith.constant -2.72614237E-10 : f32
    %148 = vector.broadcast %cst_61 : f32 to vector<8x128xf32>
    %149 = arith.mulf %148, %147 : vector<8x128xf32>
    %cst_62 = arith.constant 2.77068146E-8 : f32
    %150 = vector.broadcast %cst_62 : f32 to vector<8x128xf32>
    %151 = arith.addf %149, %150 : vector<8x128xf32>
    %152 = arith.mulf %151, %147 : vector<8x128xf32>
    %cst_63 = arith.constant -2.10102394E-6 : f32
    %153 = vector.broadcast %cst_63 : f32 to vector<8x128xf32>
    %154 = arith.addf %152, %153 : vector<8x128xf32>
    %155 = arith.mulf %154, %147 : vector<8x128xf32>
    %cst_64 = arith.constant -5.69250624E-5 : f32
    %156 = vector.broadcast %cst_64 : f32 to vector<8x128xf32>
    %157 = arith.addf %155, %156 : vector<8x128xf32>
    %158 = arith.mulf %157, %147 : vector<8x128xf32>
    %cst_65 = arith.constant -7.34990637E-4 : f32
    %159 = vector.broadcast %cst_65 : f32 to vector<8x128xf32>
    %160 = arith.addf %158, %159 : vector<8x128xf32>
    %161 = arith.mulf %160, %147 : vector<8x128xf32>
    %cst_66 = arith.constant -2.954600e-03 : f32
    %162 = vector.broadcast %cst_66 : f32 to vector<8x128xf32>
    %163 = arith.addf %161, %162 : vector<8x128xf32>
    %164 = arith.mulf %163, %147 : vector<8x128xf32>
    %cst_67 = arith.constant -0.0160960332 : f32
    %165 = vector.broadcast %cst_67 : f32 to vector<8x128xf32>
    %166 = arith.addf %164, %165 : vector<8x128xf32>
    %167 = arith.mulf %166, %146 : vector<8x128xf32>
    %cst_68 = arith.constant -1.45660715E-5 : f32
    %168 = vector.broadcast %cst_68 : f32 to vector<8x128xf32>
    %169 = arith.mulf %147, %168 : vector<8x128xf32>
    %cst_69 = arith.constant -2.13374049E-4 : f32
    %170 = vector.broadcast %cst_69 : f32 to vector<8x128xf32>
    %171 = arith.addf %169, %170 : vector<8x128xf32>
    %172 = arith.mulf %171, %147 : vector<8x128xf32>
    %cst_70 = arith.constant -0.00168282702 : f32
    %173 = vector.broadcast %cst_70 : f32 to vector<8x128xf32>
    %174 = arith.addf %172, %173 : vector<8x128xf32>
    %175 = arith.mulf %174, %147 : vector<8x128xf32>
    %cst_71 = arith.constant -0.00737332925 : f32
    %176 = vector.broadcast %cst_71 : f32 to vector<8x128xf32>
    %177 = arith.addf %175, %176 : vector<8x128xf32>
    %178 = arith.mulf %177, %147 : vector<8x128xf32>
    %cst_72 = arith.constant -0.0142647391 : f32
    %179 = vector.broadcast %cst_72 : f32 to vector<8x128xf32>
    %180 = arith.addf %178, %179 : vector<8x128xf32>
    %181 = arith.divf %167, %180 : vector<8x128xf32>
    %cst_73 = arith.constant 1.000000e+00 : f32
    %182 = vector.broadcast %cst_73 : f32 to vector<8x128xf32>
    %183 = arith.addf %182, %181 : vector<8x128xf32>
    %184 = arith.mulf %140, %183 : vector<8x128xf32>
    %185 = arith.truncf %184 : vector<8x128xf32> to vector<8x128xbf16>
    %c0_74 = arith.constant 0 : index
    %c0_75 = arith.constant 0 : index
    %c0_76 = arith.constant 0 : index
    %186 = vector.load %arg13[%c0_74, %c0_75, %c0_76] : memref<1x128x32xbf16, #tpu.memory_space<vmem>>, vector<1x128x32xbf16>
    %187 = vector.shape_cast %186 : vector<1x128x32xbf16> to vector<128x32xbf16>
    %cst_77 = arith.constant dense<0.000000e+00> : vector<8x32xf32>
    %188 = tpu.matmul %185, %187, %cst_77 {dimension_numbers = #tpu.dot_dimension_numbers<[1], [0], [0], [1], [0, 0, 1, 1], [], []>} : vector<8x128xbf16>, vector<128x32xbf16>, vector<8x32xf32> -> vector<8x32xf32>
    %c0_78 = arith.constant 0 : index
    %c0_79 = arith.constant 0 : index
    %c0_80 = arith.constant 0 : index
    %189 = vector.load %arg14[%c0_78, %c0_79, %c0_80] : memref<1x1x32xf32, #tpu.memory_space<vmem>>, vector<1x1x32xf32>
    %190 = vector.shape_cast %189 : vector<1x1x32xf32> to vector<1x32xf32>
    %191 = vector.broadcast %190 : vector<1x32xf32> to vector<8x32xf32>
    %192 = arith.addf %188, %191 : vector<8x32xf32>
    %193 = arith.addf %114, %192 : vector<8x32xf32>
    %c0_81 = arith.constant 0 : index
    %c0_82 = arith.constant 0 : index
    %194 = vector.load %arg16[%c0_81, %c0_82] : memref<8x32xf32, #tpu.memory_space<vmem>>, vector<8x32xf32>
    tpu.vector_store %arg16[%c0_81, %c0_82], %193 {strides = array<i32>} : memref<8x32xf32, #tpu.memory_space<vmem>>, vector<8x32xf32>,
    %c1_i32 = arith.constant 1 : i32
    %195 = arith.cmpi eq, %arg2, %c1_i32 : i32
    %196 = arith.extui %195 : i1 to i32
    %c0_i32_83 = arith.constant 0 : i32
    %197 = arith.cmpi ne, %196, %c0_i32_83 : i32
    scf.if %197 {
      %c0_84 = arith.constant 0 : index
      %c0_85 = arith.constant 0 : index
      %c0_86 = arith.constant 0 : index
      %198 = vector.load %arg15[%c0_84, %c0_85, %c0_86] : memref<1x8x32xf32, #tpu.memory_space<vmem>>, vector<1x8x32xf32>
      %199 = vector.shape_cast %198 : vector<1x8x32xf32> to vector<8x32xf32>
      %200 = vector.shape_cast %193 : vector<8x32xf32> to vector<1x8x32xf32>
      tpu.vector_store %arg15[%c0_84, %c0_85, %c0_86], %200 {strides = array<i32>} : memref<1x8x32xf32, #tpu.memory_space<vmem>>, vector<1x8x32xf32>,
    } else {
    }
    return
  }
  func.func @transform_0(%arg0: i32, %arg1: i32, %arg2: i32) -> (i32, i32, i32) {
    %c0_i32 = arith.constant 0 : i32
    %c0_i32_0 = arith.constant 0 : i32
    return %arg0, %arg1, %c0_i32 : i32, i32, i32
  }
  func.func @transform_1(%arg0: i32, %arg1: i32, %arg2: i32) -> (i32, i32, i32) {
    %c0_i32 = arith.constant 0 : i32
    %c0_i32_0 = arith.constant 0 : i32
    %c0_i32_1 = arith.constant 0 : i32
    return %arg0, %c0_i32, %c0_i32_0 : i32, i32, i32
  }
  func.func @transform_2(%arg0: i32, %arg1: i32, %arg2: i32) -> (i32, i32, i32) {
    %c0_i32 = arith.constant 0 : i32
    %c0_i32_0 = arith.constant 0 : i32
    %c0_i32_1 = arith.constant 0 : i32
    return %arg2, %c0_i32, %c0_i32_0 : i32, i32, i32
  }
  func.func @transform_3(%arg0: i32, %arg1: i32, %arg2: i32) -> (i32, i32, i32) {
    %c0_i32 = arith.constant 0 : i32
    %c0_i32_0 = arith.constant 0 : i32
    %c0_i32_1 = arith.constant 0 : i32
    return %arg2, %c0_i32, %c0_i32_0 : i32, i32, i32
  }
  func.func @transform_4(%arg0: i32, %arg1: i32, %arg2: i32) -> (i32, i32, i32) {
    %c0_i32 = arith.constant 0 : i32
    %c0_i32_0 = arith.constant 0 : i32
    %c0_i32_1 = arith.constant 0 : i32
    return %arg2, %c0_i32, %c0_i32_0 : i32, i32, i32
  }
  func.func @transform_5(%arg0: i32, %arg1: i32, %arg2: i32) -> (i32, i32, i32) {
    %c0_i32 = arith.constant 0 : i32
    %c0_i32_0 = arith.constant 0 : i32
    %c0_i32_1 = arith.constant 0 : i32
    return %arg2, %c0_i32, %c0_i32_0 : i32, i32, i32
  }
  func.func @transform_6(%arg0: i32, %arg1: i32, %arg2: i32) -> (i32, i32, i32) {
    %c0_i32 = arith.constant 0 : i32
    %c0_i32_0 = arith.constant 0 : i32
    %c0_i32_1 = arith.constant 0 : i32
    return %arg2, %c0_i32, %c0_i32_0 : i32, i32, i32
  }
  func.func @transform_7(%arg0: i32, %arg1: i32, %arg2: i32) -> (i32, i32, i32) {
    %c0_i32 = arith.constant 0 : i32
    %c0_i32_0 = arith.constant 0 : i32
    %c0_i32_1 = arith.constant 0 : i32
    return %arg2, %c0_i32, %c0_i32_0 : i32, i32, i32
  }
  func.func @transform_8(%arg0: i32, %arg1: i32, %arg2: i32) -> (i32, i32, i32) {
    %c0_i32 = arith.constant 0 : i32
    %c0_i32_0 = arith.constant 0 : i32
    %c0_i32_1 = arith.constant 0 : i32
    return %arg2, %c0_i32, %c0_i32_0 : i32, i32, i32
  }
  func.func @transform_9(%arg0: i32, %arg1: i32, %arg2: i32) -> (i32, i32, i32) {
    %c0_i32 = arith.constant 0 : i32
    %c0_i32_0 = arith.constant 0 : i32
    %c0_i32_1 = arith.constant 0 : i32
    return %arg2, %c0_i32, %c0_i32_0 : i32, i32, i32
  }
  func.func @transform_10(%arg0: i32, %arg1: i32, %arg2: i32) -> (i32, i32, i32) {
    %c0_i32 = arith.constant 0 : i32
    %c0_i32_0 = arith.constant 0 : i32
    %c0_i32_1 = arith.constant 0 : i32
    return %arg2, %c0_i32, %c0_i32_0 : i32, i32, i32
  }
  func.func @transform_11(%arg0: i32, %arg1: i32, %arg2: i32) -> (i32, i32, i32) {
    %c0_i32 = arith.constant 0 : i32
    %c0_i32_0 = arith.constant 0 : i32
    %c0_i32_1 = arith.constant 0 : i32
    return %arg2, %c0_i32, %c0_i32_0 : i32, i32, i32
  }
  func.func @transform_12(%arg0: i32, %arg1: i32, %arg2: i32) -> (i32, i32, i32) {
    %c0_i32 = arith.constant 0 : i32
    %c0_i32_0 = arith.constant 0 : i32
    return %arg0, %arg1, %c0_i32 : i32, i32, i32
  }
}

</mosaic_0001>

<llo_original>
// kernel: tpu_custom_call.1
$region0: #{tpu_custom_call.1}
  #allocation0 [shape = 'u32[]', space=smem, size = 0x4, offset = 0x4, fixed_abs, tag = 'smem constant byte address 0x4 - core index']
  #allocation1 [shape = 'u32[144,128]{1,0:T(1,128)}', space=vmem, size = 0x12000, scoped, tag = 'internal scratch']
  #allocation2 [shape = 'f32[8,32]{1,0:T(8,128)}', space=vmem, size = 0x1000, scoped, tag = 'scratch operand']
  #allocation3 [shape = 'bf16[16,48]{1,0:T(8,128)(2,1)}', space=vmem, size = 0x1000, scoped, tag = 'scratch operand']
  %s0 = inlined_call_operand.vmem [shape: f32[2,8,32], index: 0, kind: input, shape index: {}]
  %s1 = inlined_call_operand.vmem [shape: f32[2,16,48], index: 1, kind: input, shape index: {}]
  %s2 = inlined_call_operand.vmem [shape: bf16[2,32,32], index: 2, kind: input, shape index: {}]
  %s3 = inlined_call_operand.vmem [shape: f32[2,1,32], index: 3, kind: input, shape index: {}]
  %s4 = inlined_call_operand.vmem [shape: bf16[2,48,64], index: 4, kind: input, shape index: {}]
  %s5 = inlined_call_operand.vmem [shape: f32[2,1,64], index: 5, kind: input, shape index: {}]
  %s6 = inlined_call_operand.vmem [shape: bf16[2,32,32], index: 6, kind: input, shape index: {}]
  %s7 = inlined_call_operand.vmem [shape: f32[2,1,32], index: 7, kind: input, shape index: {}]
  %s8 = inlined_call_operand.hbm [shape: bf16[2,32,128], index: 8, kind: input, shape index: {}]
  %s9 = inlined_call_operand.vmem [shape: f32[2,1,128], index: 9, kind: input, shape index: {}]
  %s10 = inlined_call_operand.vmem [shape: bf16[2,128,32], index: 10, kind: input, shape index: {}]
  %s11 = inlined_call_operand.vmem [shape: f32[2,1,32], index: 11, kind: input, shape index: {}]
  %s12 = inlined_call_operand.hbm [shape: f32[2,8,32], index: 12, kind: output, shape index: {}]
  %s13 = sld [smem:[#allocation0]]
  $region93: #{tpu_custom_call.1} parent=0
    _
  %s15 = ssub.s32 1, %s13
  %s16 = scalar_select 0, %s15, %s13
  $region1: #{tpu_custom_call.1} parent=0
    #allocation4 [shape = 'u8[16384]{0}', space=vmem, size = 0x4000, scoped, tag = 'input window, operand 8']
    #allocation5 [shape = 's32[2]{0}', space=sflag, size = 0x8, scoped, tag = 'scoped memory for tpu_custom_call.1']
    #allocation6 [shape = 's32[2]{0}', space=sflag, size = 0x8, scoped, tag = 'scoped memory for tpu_custom_call.1']
    #allocation7 [shape = 'u8[8192]{0}', space=vmem, size = 0x2000, scoped, tag = 'output window, operand 0']
    %17 = vsyncpa [#allocation5], 0
    %s18 = scalar_lea.sflag [#allocation5], 1
    %19 = vsyncpa %s18, 0
    %20 = vsyncpa [#allocation6], 0
    %s21 = scalar_lea.sflag [#allocation6], 1
    %22 = vsyncpa %s21, 0
    loop: start=0, step=1, limit=6
    $region2: #{tpu_custom_call.1} parent=1 // loop_pre_header
      _
    $region3: #{tpu_custom_call.1} parent=1 // loop_header
      %s24 = sphi 0, %s28
      %p25 = scmp.ge.s32.totalorder %s24, 6
      %s31 = sphi 0, %s50
      %s32 = sphi 0, %s46
      %s33 = sphi 0, %s42
      %s34 = sphi 0, %s31
      %s35 = sphi 0, %s32
      %s36 = sphi 0, %s33
      %s37 = sphi 0, %s34
      %s38 = sphi 0, %s35
      %s39 = sphi 0, %s36
      %s55 = sphi 0, %s57
      %s58 = sphi 0, %s55
      %s59 = sphi 0, %s58
      %s75 = sphi 0, %s59
      %s81 = sphi 0, %s83
      %s84 = sphi 0, %s81
      %s85 = sphi 0, %s84
      %s101 = sphi 0, %s85
      %s107 = sphi 0, %s109
      %s110 = sphi 0, %s107
      %s111 = sphi 0, %s110
      %s127 = sphi 0, %s111
      %s133 = sphi 0, %s135
      %s136 = sphi 0, %s133
      %s137 = sphi 0, %s136
      %s153 = sphi 0, %s137
      %s159 = sphi 0, %s161
      %s162 = sphi 0, %s159
      %s163 = sphi 0, %s162
      %s179 = sphi 0, %s163
      %s185 = sphi 0, %s187
      %s188 = sphi 0, %s185
      %s189 = sphi 0, %s188
      %s205 = sphi 0, %s189
      %s211 = sphi 0, %s213
      %s214 = sphi 0, %s211
      %s215 = sphi 0, %s214
      %s231 = sphi 0, %s215
      %s237 = sphi 0, %s239
      %s240 = sphi 0, %s237
      %s241 = sphi 0, %s240
      %s257 = sphi 0, %s241
      %s263 = sphi 0, %s265
      %s266 = sphi 0, %s263
      %s267 = sphi 0, %s266
      %s283 = sphi 0, %s267
      %s289 = sphi 0, %s291
      %s292 = sphi 0, %s289
      %s293 = sphi 0, %s292
      %s309 = sphi 0, %s293
      %s315 = sphi 0, %s317
      %s318 = sphi 0, %s315
      %s319 = sphi 0, %s318
      %s335 = sphi 0, %s319
      %s341 = sphi 0, %s343
      %s344 = sphi 0, %s341
      %s345 = sphi 0, %s344
      %s361 = sphi 0, %s345
      %s369 = sphi 0, %s371
      %s372 = sphi 0, %s369
      %s373 = sphi 0, %s372
      %s389 = sphi 0, %s373
    $region4: #{tpu_custom_call.1} parent=1 // loop_header_branch
      %27 = sbr.rel (%p25) target = $region8
    $region5: #{tpu_custom_call.1} parent=1 // loop_body
      %s29 = ssub.s32 %s24, 1
      %s30 = ssub.s32 %s24, 2
      %s40 = sadd.s32 1, %s33
      %p41 = scmp.ge.s32.totalorder %s40, 2
      %s42 = scalar_select %p41, 0, %s40
      %s43 = sadd.s32 1, %s32
      %s44 = scalar_select %p41, %s43, %s32
      %p45 = scmp.ge.s32.totalorder %s44, 1
      %s46 = scalar_select %p45, 0, %s44
      %s47 = sadd.s32 1, %s31
      %s48 = scalar_select %p45, %s47, %s31
      %p49 = scmp.ge.s32.totalorder %s48, 2
      %s50 = scalar_select %p49, 0, %s48
      %s51 = ssub.s32 %s31, %s50
      %s52 = ssub.s32 %s32, %s46
      %s53 = sor.u32 %s51, %s52
      %p54 = scmp.eq.s32.totalorder %s53, 0
      %s56 = sadd.s32 %s55, 1
      %s57 = scalar_select %p54, %s55, %s56
      %p60 = pneg %p54
      %p61 = scmp.eq.s32.totalorder %s24, 3
      %p62 = por %p60, %p61
      %p63 = scmp.ne.s32.totalorder %s55, %s58
      %p64 = scmp.eq.s32.totalorder %s24, 0
      %p65 = por %p63, %p64
      %p66 = scmp.ne.s32.totalorder %s55, %s58
      %p67 = scmp.eq.s32.totalorder %s29, 3
      %p68 = por %p66, %p67
      %p69 = scmp.ne.s32.totalorder %s58, %s59
      %p70 = scmp.eq.s32.totalorder %s29, 0
      %p71 = por %p69, %p70
      %p72 = scmp.ne.s32.totalorder %s58, %s59
      %p73 = scmp.eq.s32.totalorder %s30, 3
      %p74 = por %p72, %p73
      %p76 = scmp.ne.s32.totalorder %s59, %s75
      %p77 = scmp.eq.s32.totalorder %s30, 0
      %p78 = por %p76, %p77
      %s79 = ssub.s32 %s31, %s50
      %p80 = scmp.eq.s32.totalorder %s79, 0
      %s82 = sadd.s32 %s81, 1
      %s83 = scalar_select %p80, %s81, %s82
      %p86 = pneg %p80
      %p87 = scmp.eq.s32.totalorder %s24, 3
      %p88 = por %p86, %p87
      %p89 = scmp.ne.s32.totalorder %s81, %s84
      %p90 = scmp.eq.s32.totalorder %s24, 0
      %p91 = por %p89, %p90
      %p92 = scmp.ne.s32.totalorder %s81, %s84
      %p93 = scmp.eq.s32.totalorder %s29, 3
      %p94 = por %p92, %p93
      %p95 = scmp.ne.s32.totalorder %s84, %s85
      %p96 = scmp.eq.s32.totalorder %s29, 0
      %p97 = por %p95, %p96
      %p98 = scmp.ne.s32.totalorder %s84, %s85
      %p99 = scmp.eq.s32.totalorder %s30, 3
      %p100 = por %p98, %p99
      %p102 = scmp.ne.s32.totalorder %s85, %s101
      %p103 = scmp.eq.s32.totalorder %s30, 0
      %p104 = por %p102, %p103
      %s105 = ssub.s32 %s33, %s42
      %p106 = scmp.eq.s32.totalorder %s105, 0
      %s108 = sadd.s32 %s107, 1
      %s109 = scalar_select %p106, %s107, %s108
      %p112 = pneg %p106
      %p113 = scmp.eq.s32.totalorder %s24, 3
      %p114 = por %p112, %p113
      %p115 = scmp.ne.s32.totalorder %s107, %s110
      %p116 = scmp.eq.s32.totalorder %s24, 0
      %p117 = por %p115, %p116
      %p118 = scmp.ne.s32.totalorder %s107, %s110
      %p119 = scmp.eq.s32.totalorder %s29, 3
      %p120 = por %p118, %p119
      %p121 = scmp.ne.s32.totalorder %s110, %s111
      %p122 = scmp.eq.s32.totalorder %s29, 0
      %p123 = por %p121, %p122
      %p124 = scmp.ne.s32.totalorder %s110, %s111
      %p125 = scmp.eq.s32.totalorder %s30, 3
      %p126 = por %p124, %p125
      %p128 = scmp.ne.s32.totalorder %s111, %s127
      %p129 = scmp.eq.s32.totalorder %s30, 0
      %p130 = por %p128, %p129
      %s131 = ssub.s32 %s33, %s42
      %p132 = scmp.eq.s32.totalorder %s131, 0
      %s134 = sadd.s32 %s133, 1
      %s135 = scalar_select %p132, %s133, %s134
      %p138 = pneg %p132
      %p139 = scmp.eq.s32.totalorder %s24, 3
      %p140 = por %p138, %p139
      %p141 = scmp.ne.s32.totalorder %s133, %s136
      %p142 = scmp.eq.s32.totalorder %s24, 0
      %p143 = por %p141, %p142
      %p144 = scmp.ne.s32.totalorder %s133, %s136
      %p145 = scmp.eq.s32.totalorder %s29, 3
      %p146 = por %p144, %p145
      %p147 = scmp.ne.s32.totalorder %s136, %s137
      %p148 = scmp.eq.s32.totalorder %s29, 0
      %p149 = por %p147, %p148
      %p150 = scmp.ne.s32.totalorder %s136, %s137
      %p151 = scmp.eq.s32.totalorder %s30, 3
      %p152 = por %p150, %p151
      %p154 = scmp.ne.s32.totalorder %s137, %s153
      %p155 = scmp.eq.s32.totalorder %s30, 0
      %p156 = por %p154, %p155
      %s157 = ssub.s32 %s33, %s42
      %p158 = scmp.eq.s32.totalorder %s157, 0
      %s160 = sadd.s32 %s159, 1
      %s161 = scalar_select %p158, %s159, %s160
      %p164 = pneg %p158
      %p165 = scmp.eq.s32.totalorder %s24, 3
      %p166 = por %p164, %p165
      %p167 = scmp.ne.s32.totalorder %s159, %s162
      %p168 = scmp.eq.s32.totalorder %s24, 0
      %p169 = por %p167, %p168
      %p170 = scmp.ne.s32.totalorder %s159, %s162
      %p171 = scmp.eq.s32.totalorder %s29, 3
      %p172 = por %p170, %p171
      %p173 = scmp.ne.s32.totalorder %s162, %s163
      %p174 = scmp.eq.s32.totalorder %s29, 0
      %p175 = por %p173, %p174
      %p176 = scmp.ne.s32.totalorder %s162, %s163
      %p177 = scmp.eq.s32.totalorder %s30, 3
      %p178 = por %p176, %p177
      %p180 = scmp.ne.s32.totalorder %s163, %s179
      %p181 = scmp.eq.s32.totalorder %s30, 0
      %p182 = por %p180, %p181
      %s183 = ssub.s32 %s33, %s42
      %p184 = scmp.eq.s32.totalorder %s183, 0
      %s186 = sadd.s32 %s185, 1
      %s187 = scalar_select %p184, %s185, %s186
      %p190 = pneg %p184
      %p191 = scmp.eq.s32.totalorder %s24, 3
      %p192 = por %p190, %p191
      %p193 = scmp.ne.s32.totalorder %s185, %s188
      %p194 = scmp.eq.s32.totalorder %s24, 0
      %p195 = por %p193, %p194
      %p196 = scmp.ne.s32.totalorder %s185, %s188
      %p197 = scmp.eq.s32.totalorder %s29, 3
      %p198 = por %p196, %p197
      %p199 = scmp.ne.s32.totalorder %s188, %s189
      %p200 = scmp.eq.s32.totalorder %s29, 0
      %p201 = por %p199, %p200
      %p202 = scmp.ne.s32.totalorder %s188, %s189
      %p203 = scmp.eq.s32.totalorder %s30, 3
      %p204 = por %p202, %p203
      %p206 = scmp.ne.s32.totalorder %s189, %s205
      %p207 = scmp.eq.s32.totalorder %s30, 0
      %p208 = por %p206, %p207
      %s209 = ssub.s32 %s33, %s42
      %p210 = scmp.eq.s32.totalorder %s209, 0
      %s212 = sadd.s32 %s211, 1
      %s213 = scalar_select %p210, %s211, %s212
      %p216 = pneg %p210
      %p217 = scmp.eq.s32.totalorder %s24, 3
      %p218 = por %p216, %p217
      %p219 = scmp.ne.s32.totalorder %s211, %s214
      %p220 = scmp.eq.s32.totalorder %s24, 0
      %p221 = por %p219, %p220
      %p222 = scmp.ne.s32.totalorder %s211, %s214
      %p223 = scmp.eq.s32.totalorder %s29, 3
      %p224 = por %p222, %p223
      %p225 = scmp.ne.s32.totalorder %s214, %s215
      %p226 = scmp.eq.s32.totalorder %s29, 0
      %p227 = por %p225, %p226
      %p228 = scmp.ne.s32.totalorder %s214, %s215
      %p229 = scmp.eq.s32.totalorder %s30, 3
      %p230 = por %p228, %p229
      %p232 = scmp.ne.s32.totalorder %s215, %s231
      %p233 = scmp.eq.s32.totalorder %s30, 0
      %p234 = por %p232, %p233
      %s235 = ssub.s32 %s33, %s42
      %p236 = scmp.eq.s32.totalorder %s235, 0
      %s238 = sadd.s32 %s237, 1
      %s239 = scalar_select %p236, %s237, %s238
      %p242 = pneg %p236
      %p243 = scmp.eq.s32.totalorder %s24, 3
      %p244 = por %p242, %p243
      %p245 = scmp.ne.s32.totalorder %s237, %s240
      %p246 = scmp.eq.s32.totalorder %s24, 0
      %p247 = por %p245, %p246
      %p248 = scmp.ne.s32.totalorder %s237, %s240
      %p249 = scmp.eq.s32.totalorder %s29, 3
      %p250 = por %p248, %p249
      %p251 = scmp.ne.s32.totalorder %s240, %s241
      %p252 = scmp.eq.s32.totalorder %s29, 0
      %p253 = por %p251, %p252
      %p254 = scmp.ne.s32.totalorder %s240, %s241
      %p255 = scmp.eq.s32.totalorder %s30, 3
      %p256 = por %p254, %p255
      %p258 = scmp.ne.s32.totalorder %s241, %s257
      %p259 = scmp.eq.s32.totalorder %s30, 0
      %p260 = por %p258, %p259
      %s261 = ssub.s32 %s33, %s42
      %p262 = scmp.eq.s32.totalorder %s261, 0
      %s264 = sadd.s32 %s263, 1
      %s265 = scalar_select %p262, %s263, %s264
      %p268 = pneg %p262
      %p269 = scmp.eq.s32.totalorder %s24, 3
      %p270 = por %p268, %p269
      %p271 = scmp.ne.s32.totalorder %s263, %s266
      %p272 = scmp.eq.s32.totalorder %s24, 0
      %p273 = por %p271, %p272
      %p274 = scmp.ne.s32.totalorder %s263, %s266
      %p275 = scmp.eq.s32.totalorder %s29, 3
      %p276 = por %p274, %p275
      %p277 = scmp.ne.s32.totalorder %s266, %s267
      %p278 = scmp.eq.s32.totalorder %s29, 0
      %p279 = por %p277, %p278
      %p280 = scmp.ne.s32.totalorder %s266, %s267
      %p281 = scmp.eq.s32.totalorder %s30, 3
      %p282 = por %p280, %p281
      %p284 = scmp.ne.s32.totalorder %s267, %s283
      %p285 = scmp.eq.s32.totalorder %s30, 0
      %p286 = por %p284, %p285
      %s287 = ssub.s32 %s33, %s42
      %p288 = scmp.eq.s32.totalorder %s287, 0
      %s290 = sadd.s32 %s289, 1
      %s291 = scalar_select %p288, %s289, %s290
      %p294 = pneg %p288
      %p295 = scmp.eq.s32.totalorder %s24, 3
      %p296 = por %p294, %p295
      %p297 = scmp.ne.s32.totalorder %s289, %s292
      %p298 = scmp.eq.s32.totalorder %s24, 0
      %p299 = por %p297, %p298
      %p300 = scmp.ne.s32.totalorder %s289, %s292
      %p301 = scmp.eq.s32.totalorder %s29, 3
      %p302 = por %p300, %p301
      %p303 = scmp.ne.s32.totalorder %s292, %s293
      %p304 = scmp.eq.s32.totalorder %s29, 0
      %p305 = por %p303, %p304
      %p306 = scmp.ne.s32.totalorder %s292, %s293
      %p307 = scmp.eq.s32.totalorder %s30, 3
      %p308 = por %p306, %p307
      %p310 = scmp.ne.s32.totalorder %s293, %s309
      %p311 = scmp.eq.s32.totalorder %s30, 0
      %p312 = por %p310, %p311
      %s313 = ssub.s32 %s33, %s42
      %p314 = scmp.eq.s32.totalorder %s313, 0
      %s316 = sadd.s32 %s315, 1
      %s317 = scalar_select %p314, %s315, %s316
      %p320 = pneg %p314
      %p321 = scmp.eq.s32.totalorder %s24, 3
      %p322 = por %p320, %p321
      %p323 = scmp.ne.s32.totalorder %s315, %s318
      %p324 = scmp.eq.s32.totalorder %s24, 0
      %p325 = por %p323, %p324
      %p326 = scmp.ne.s32.totalorder %s315, %s318
      %p327 = scmp.eq.s32.totalorder %s29, 3
      %p328 = por %p326, %p327
      %p329 = scmp.ne.s32.totalorder %s318, %s319
      %p330 = scmp.eq.s32.totalorder %s29, 0
      %p331 = por %p329, %p330
      %p332 = scmp.ne.s32.totalorder %s318, %s319
      %p333 = scmp.eq.s32.totalorder %s30, 3
      %p334 = por %p332, %p333
      %p336 = scmp.ne.s32.totalorder %s319, %s335
      %p337 = scmp.eq.s32.totalorder %s30, 0
      %p338 = por %p336, %p337
      %s339 = ssub.s32 %s33, %s42
      %p340 = scmp.eq.s32.totalorder %s339, 0
      %s342 = sadd.s32 %s341, 1
      %s343 = scalar_select %p340, %s341, %s342
      %p346 = pneg %p340
      %p347 = scmp.eq.s32.totalorder %s24, 3
      %p348 = por %p346, %p347
      %p349 = scmp.ne.s32.totalorder %s341, %s344
      %p350 = scmp.eq.s32.totalorder %s24, 0
      %p351 = por %p349, %p350
      %p352 = scmp.ne.s32.totalorder %s341, %s344
      %p353 = scmp.eq.s32.totalorder %s29, 3
      %p354 = por %p352, %p353
      %p355 = scmp.ne.s32.totalorder %s344, %s345
      %p356 = scmp.eq.s32.totalorder %s29, 0
      %p357 = por %p355, %p356
      %p358 = scmp.ne.s32.totalorder %s344, %s345
      %p359 = scmp.eq.s32.totalorder %s30, 3
      %p360 = por %p358, %p359
      %p362 = scmp.ne.s32.totalorder %s345, %s361
      %p363 = scmp.eq.s32.totalorder %s30, 0
      %p364 = por %p362, %p363
      %s365 = ssub.s32 %s31, %s50
      %s366 = ssub.s32 %s32, %s46
      %s367 = sor.u32 %s365, %s366
      %p368 = scmp.eq.s32.totalorder %s367, 0
      %s370 = sadd.s32 %s369, 1
      %s371 = scalar_select %p368, %s369, %s370
      %p374 = pneg %p368
      %p375 = scmp.eq.s32.totalorder %s24, 3
      %p376 = por %p374, %p375
      %p377 = scmp.ne.s32.totalorder %s369, %s372
      %p378 = scmp.eq.s32.totalorder %s24, 0
      %p379 = por %p377, %p378
      %p380 = scmp.ne.s32.totalorder %s369, %s372
      %p381 = scmp.eq.s32.totalorder %s29, 3
      %p382 = por %p380, %p381
      %p383 = scmp.ne.s32.totalorder %s372, %s373
      %p384 = scmp.eq.s32.totalorder %s29, 0
      %p385 = por %p383, %p384
      %p386 = scmp.ne.s32.totalorder %s372, %s373
      %p387 = scmp.eq.s32.totalorder %s30, 3
      %p388 = por %p386, %p387
      %p390 = scmp.ne.s32.totalorder %s373, %s389
      %p391 = scmp.eq.s32.totalorder %s30, 0
      %p392 = por %p390, %p391
      %p393 = scmp.le.s32.totalorder 1, %s24
      %p394 = scmp.lt.s32.totalorder %s24, 5
      %p395 = pnand %p393, %p394
      %p396 = pneg %p395
      // Predicated region
      $region9: #{tpu_custom_call.1} parent=5 // pred_check
        _
      $region10: #{tpu_custom_call.1} parent=5 // pred_check_branch
        %398 = sbr.rel (%p395) target = $region12
      $region11: #{tpu_custom_call.1} parent=5 // pred_region
        %s399 = ssub.s32 %s24, 1
      $region12: #{tpu_custom_call.1} parent=5 // pred_fallthru
        _
      %p400 = scmp.lt.s32.totalorder %s24, 4
      // Predicated region
      $region13: #{tpu_custom_call.1} parent=5 // pred_check
        %p401 = pneg %p400
      $region14: #{tpu_custom_call.1} parent=5 // pred_check_branch
        %403 = sbr.rel (%p401) target = $region16
      $region15: #{tpu_custom_call.1} parent=5 // pred_region
        // Predicated region
        $region17: #{tpu_custom_call.1} parent=15 // pred_check
          %p404 = pneg %p65
        $region18: #{tpu_custom_call.1} parent=15 // pred_check_branch
          %406 = sbr.rel (%p404) target = $region20
        $region19: #{tpu_custom_call.1} parent=15 // pred_region
          %p407 = scmp.lt.s32.totalorder %s31, 1
          %s408 = scalar_select %p407, %s31, 1
          %p409 = scmp.lt.s32.totalorder %s32, 0
          %s410 = scalar_select %p409, %s32, 0
          %s411 = sadd.s32 %s410, %s408
          %s412 = smul.addr %s411, 8
          %s413 = scalar_lea.vmem %s0, %s412
        $region20: #{tpu_custom_call.1} parent=15 // pred_fallthru
          _
        // Predicated region
        $region21: #{tpu_custom_call.1} parent=15 // pred_check
          %p414 = pneg %p91
        $region22: #{tpu_custom_call.1} parent=15 // pred_check_branch
          %416 = sbr.rel (%p414) target = $region24
        $region23: #{tpu_custom_call.1} parent=15 // pred_region
          %p417 = scmp.lt.s32.totalorder %s31, 1
          %s418 = scalar_select %p417, %s31, 1
          %s419 = smul.addr %s418, 2
          %s420 = smul.addr %s419, 8
          %s421 = scalar_lea.vmem %s1, %s420
        $region24: #{tpu_custom_call.1} parent=15 // pred_fallthru
          _
        // Predicated region
        $region25: #{tpu_custom_call.1} parent=15 // pred_check
          %p422 = pneg %p117
        $region26: #{tpu_custom_call.1} parent=15 // pred_check_branch
          %424 = sbr.rel (%p422) target = $region28
        $region27: #{tpu_custom_call.1} parent=15 // pred_region
          %p425 = scmp.lt.s32.totalorder %s33, 1
          %s426 = scalar_select %p425, %s33, 1
          %s427 = smul.addr %s426, 4
          %s428 = smul.addr %s427, 4
          %s429 = scalar_lea.vmem %s2, %s428
        $region28: #{tpu_custom_call.1} parent=15 // pred_fallthru
          _
        // Predicated region
        $region29: #{tpu_custom_call.1} parent=15 // pred_check
          %p430 = pneg %p143
        $region30: #{tpu_custom_call.1} parent=15 // pred_check_branch
          %432 = sbr.rel (%p430) target = $region32
        $region31: #{tpu_custom_call.1} parent=15 // pred_region
          %p433 = scmp.lt.s32.totalorder %s33, 1
          %s434 = scalar_select %p433, %s33, 1
          %s435 = scalar_lea.vmem %s3, %s434
        $region32: #{tpu_custom_call.1} parent=15 // pred_fallthru
          _
        // Predicated region
        $region33: #{tpu_custom_call.1} parent=15 // pred_check
          %p436 = pneg %p169
        $region34: #{tpu_custom_call.1} parent=15 // pred_check_branch
          %438 = sbr.rel (%p436) target = $region36
        $region35: #{tpu_custom_call.1} parent=15 // pred_region
          %p439 = scmp.lt.s32.totalorder %s33, 1
          %s440 = scalar_select %p439, %s33, 1
          %s441 = smul.addr %s440, 6
          %s442 = smul.addr %s441, 4
          %s443 = scalar_lea.vmem %s4, %s442
        $region36: #{tpu_custom_call.1} parent=15 // pred_fallthru
          _
        // Predicated region
        $region37: #{tpu_custom_call.1} parent=15 // pred_check
          %p444 = pneg %p195
        $region38: #{tpu_custom_call.1} parent=15 // pred_check_branch
          %446 = sbr.rel (%p444) target = $region40
        $region39: #{tpu_custom_call.1} parent=15 // pred_region
          %p447 = scmp.lt.s32.totalorder %s33, 1
          %s448 = scalar_select %p447, %s33, 1
          %s449 = scalar_lea.vmem %s5, %s448
        $region40: #{tpu_custom_call.1} parent=15 // pred_fallthru
          _
        // Predicated region
        $region41: #{tpu_custom_call.1} parent=15 // pred_check
          %p450 = pneg %p221
        $region42: #{tpu_custom_call.1} parent=15 // pred_check_branch
          %452 = sbr.rel (%p450) target = $region44
        $region43: #{tpu_custom_call.1} parent=15 // pred_region
          %p453 = scmp.lt.s32.totalorder %s33, 1
          %s454 = scalar_select %p453, %s33, 1
          %s455 = smul.addr %s454, 4
          %s456 = smul.addr %s455, 4
          %s457 = scalar_lea.vmem %s6, %s456
        $region44: #{tpu_custom_call.1} parent=15 // pred_fallthru
          _
        // Predicated region
        $region45: #{tpu_custom_call.1} parent=15 // pred_check
          %p458 = pneg %p247
        $region46: #{tpu_custom_call.1} parent=15 // pred_check_branch
          %460 = sbr.rel (%p458) target = $region48
        $region47: #{tpu_custom_call.1} parent=15 // pred_region
          %p461 = scmp.lt.s32.totalorder %s33, 1
          %s462 = scalar_select %p461, %s33, 1
          %s463 = scalar_lea.vmem %s7, %s462
        $region48: #{tpu_custom_call.1} parent=15 // pred_fallthru
          _
        // Predicated region
        $region49: #{tpu_custom_call.1} parent=15 // pred_check
          %p464 = pneg %p273
        $region50: #{tpu_custom_call.1} parent=15 // pred_check_branch
          %466 = sbr.rel (%p464) target = $region52
        $region51: #{tpu_custom_call.1} parent=15 // pred_region
          %s467 = sand.u32 %s263, 1
          %s468 = scalar_lea.sflag [#allocation5], %s467
          %s469 = sand.u32 %s263, 1
          %s470 = smul.addr %s469, 16
          %s471 = scalar_lea.vmem [#allocation4], %s470
          %s473 = ssub.s32 256, 256
          %474 = vsyncadd %s468, %s473
          %s475 = smul.addr %s33, 4
          %s476 = smul.addr %s475, 64
          %s477 = scalar_lea.hbm %s8, %s476
          %s478 = sshll.u32 %s471, 4
          %s479 = int_to_ptr.vmem [resolvable:$true] %s478
          %484 = dma.hbm_to_vmem [thread:$0]  %s477, 256, %s479, %s468, 64, 64, 4
        $region52: #{tpu_custom_call.1} parent=15 // pred_fallthru
          _
        // Predicated region
        $region53: #{tpu_custom_call.1} parent=15 // pred_check
          %p485 = pneg %p299
        $region54: #{tpu_custom_call.1} parent=15 // pred_check_branch
          %487 = sbr.rel (%p485) target = $region56
        $region55: #{tpu_custom_call.1} parent=15 // pred_region
          %p488 = scmp.lt.s32.totalorder %s33, 1
          %s489 = scalar_select %p488, %s33, 1
          %s490 = scalar_lea.vmem %s9, %s489
        $region56: #{tpu_custom_call.1} parent=15 // pred_fallthru
          _
        // Predicated region
        $region57: #{tpu_custom_call.1} parent=15 // pred_check
          %p491 = pneg %p325
        $region58: #{tpu_custom_call.1} parent=15 // pred_check_branch
          %493 = sbr.rel (%p491) target = $region60
        $region59: #{tpu_custom_call.1} parent=15 // pred_region
          %p494 = scmp.lt.s32.totalorder %s33, 1
          %s495 = scalar_select %p494, %s33, 1
          %s496 = smul.addr %s495, 16
          %s497 = smul.addr %s496, 4
          %s498 = scalar_lea.vmem %s10, %s497
        $region60: #{tpu_custom_call.1} parent=15 // pred_fallthru
          _
        // Predicated region
        $region61: #{tpu_custom_call.1} parent=15 // pred_check
          %p499 = pneg %p351
        $region62: #{tpu_custom_call.1} parent=15 // pred_check_branch
          %501 = sbr.rel (%p499) target = $region64
        $region63: #{tpu_custom_call.1} parent=15 // pred_region
          %p502 = scmp.lt.s32.totalorder %s33, 1
          %s503 = scalar_select %p502, %s33, 1
          %s504 = scalar_lea.vmem %s11, %s503
        $region64: #{tpu_custom_call.1} parent=15 // pred_fallthru
          _
      $region16: #{tpu_custom_call.1} parent=5 // pred_fallthru
        _
      %p505 = scmp.le.s32.totalorder 1, %s24
      %p506 = scmp.lt.s32.totalorder %s24, 5
      %p507 = pnand %p505, %p506
      %p508 = pneg %p507
      // Predicated region
      $region65: #{tpu_custom_call.1} parent=5 // pred_check
        _
      $region66: #{tpu_custom_call.1} parent=5 // pred_check_branch
        %510 = sbr.rel (%p507) target = $region68
      $region67: #{tpu_custom_call.1} parent=5 // pred_region
        %s511 = ssub.s32 %s24, 1
        %s512 = sand.u32 %s266, 1
        %s513 = scalar_lea.sflag [#allocation5], %s512
        %s514 = sand.u32 %s266, 1
        %s515 = smul.addr %s514, 16
        %s516 = scalar_lea.vmem [#allocation4], %s515
        // Predicated region
        $region69: #{tpu_custom_call.1} parent=67 // pred_check
          %p517 = pneg %p279
        $region70: #{tpu_custom_call.1} parent=67 // pred_check_branch
          %519 = sbr.rel (%p517) target = $region72
        $region71: #{tpu_custom_call.1} parent=67 // pred_region
          %520 = dma.done %s513, 256
        $region72: #{tpu_custom_call.1} parent=67 // pred_fallthru
          _
        %p521 = scmp.lt.s32.totalorder %s34, 1
        %s522 = scalar_select %p521, %s34, 1
        %p523 = scmp.lt.s32.totalorder %s35, 0
        %s524 = scalar_select %p523, %s35, 0
        %s525 = sadd.s32 %s524, %s522
        %s526 = smul.addr %s525, 8
        %s527 = scalar_lea.vmem %s0, %s526
        %p528 = pneg %p71
        %p529 = pneg %p68
        %p530 = scmp.lt.s32.totalorder %s34, 1
        %s531 = scalar_select %p530, %s34, 1
        %s532 = smul.addr %s531, 2
        %s533 = smul.addr %s532, 8
        %s534 = scalar_lea.vmem %s1, %s533
        %p535 = pneg %p97
        %p536 = pneg %p94
        %p537 = scmp.lt.s32.totalorder %s36, 1
        %s538 = scalar_select %p537, %s36, 1
        %s539 = smul.addr %s538, 4
        %s540 = smul.addr %s539, 4
        %s541 = scalar_lea.vmem %s2, %s540
        %p542 = pneg %p123
        %p543 = pneg %p120
        %p544 = scmp.lt.s32.totalorder %s36, 1
        %s545 = scalar_select %p544, %s36, 1
        %s546 = scalar_lea.vmem %s3, %s545
        %p547 = pneg %p149
        %p548 = pneg %p146
        %p549 = scmp.lt.s32.totalorder %s36, 1
        %s550 = scalar_select %p549, %s36, 1
        %s551 = smul.addr %s550, 6
        %s552 = smul.addr %s551, 4
        %s553 = scalar_lea.vmem %s4, %s552
        %p554 = pneg %p175
        %p555 = pneg %p172
        %p556 = scmp.lt.s32.totalorder %s36, 1
        %s557 = scalar_select %p556, %s36, 1
        %s558 = scalar_lea.vmem %s5, %s557
        %p559 = pneg %p201
        %p560 = pneg %p198
        %p561 = scmp.lt.s32.totalorder %s36, 1
        %s562 = scalar_select %p561, %s36, 1
        %s563 = smul.addr %s562, 4
        %s564 = smul.addr %s563, 4
        %s565 = scalar_lea.vmem %s6, %s564
        %p566 = pneg %p227
        %p567 = pneg %p224
        %p568 = scmp.lt.s32.totalorder %s36, 1
        %s569 = scalar_select %p568, %s36, 1
        %s570 = scalar_lea.vmem %s7, %s569
        %p571 = pneg %p253
        %p572 = pneg %p250
        %s573 = sand.u32 %s266, 1
        %s574 = scalar_lea.sflag [#allocation5], %s573
        %s575 = sand.u32 %s266, 1
        %s576 = smul.addr %s575, 16
        %s577 = scalar_lea.vmem [#allocation4], %s576
        %p578 = pneg %p279
        %p579 = pneg %p276
        %p580 = scmp.lt.s32.totalorder %s36, 1
        %s581 = scalar_select %p580, %s36, 1
        %s582 = scalar_lea.vmem %s9, %s581
        %p583 = pneg %p305
        %p584 = pneg %p302
        %p585 = scmp.lt.s32.totalorder %s36, 1
        %s586 = scalar_select %p585, %s36, 1
        %s587 = smul.addr %s586, 16
        %s588 = smul.addr %s587, 4
        %s589 = scalar_lea.vmem %s10, %s588
        %p590 = pneg %p331
        %p591 = pneg %p328
        %p592 = scmp.lt.s32.totalorder %s36, 1
        %s593 = scalar_select %p592, %s36, 1
        %s594 = scalar_lea.vmem %s11, %s593
        %p595 = pneg %p357
        %p596 = pneg %p354
        %p597 = pneg %p385
        %p598 = pneg %p382
        %s599 = sand.u32 %s372, 1
        %s600 = scalar_lea.sflag [#allocation6], %s599
        %s601 = sand.u32 %s372, 1
        %s602 = smul.addr %s601, 8
        %s603 = scalar_lea.vmem [#allocation7], %s602
        %p604 = scmp.lt.s32.totalorder %s34, 1
        %s605 = scalar_select %p604, %s34, 1
        %p606 = scmp.lt.s32.totalorder %s35, 0
        %s607 = scalar_select %p606, %s35, 0
        %s608 = sadd.s32 %s607, %s605
        %s609 = smul.addr %s608, 8
        %s610 = scalar_lea.vmem %s0, %s609
        %p611 = scmp.lt.s32.totalorder %s34, 1
        %s612 = scalar_select %p611, %s34, 1
        %s613 = smul.addr %s612, 2
        %s614 = smul.addr %s613, 8
        %s615 = scalar_lea.vmem %s1, %s614
        %p616 = scmp.lt.s32.totalorder %s36, 1
        %s617 = scalar_select %p616, %s36, 1
        %s618 = smul.addr %s617, 4
        %s619 = smul.addr %s618, 4
        %s620 = scalar_lea.vmem %s2, %s619
        %p621 = scmp.lt.s32.totalorder %s36, 1
        %s622 = scalar_select %p621, %s36, 1
        %s623 = scalar_lea.vmem %s3, %s622
        %p624 = scmp.lt.s32.totalorder %s36, 1
        %s625 = scalar_select %p624, %s36, 1
        %s626 = smul.addr %s625, 6
        %s627 = smul.addr %s626, 4
        %s628 = scalar_lea.vmem %s4, %s627
        %p629 = scmp.lt.s32.totalorder %s36, 1
        %s630 = scalar_select %p629, %s36, 1
        %s631 = scalar_lea.vmem %s5, %s630
        %p632 = scmp.lt.s32.totalorder %s36, 1
        %s633 = scalar_select %p632, %s36, 1
        %s634 = smul.addr %s633, 4
        %s635 = smul.addr %s634, 4
        %s636 = scalar_lea.vmem %s6, %s635
        %p637 = scmp.lt.s32.totalorder %s36, 1
        %s638 = scalar_select %p637, %s36, 1
        %s639 = scalar_lea.vmem %s7, %s638
        %p640 = scmp.lt.s32.totalorder %s36, 1
        %s641 = scalar_select %p640, %s36, 1
        %s642 = scalar_lea.vmem %s9, %s641
        %p643 = scmp.lt.s32.totalorder %s36, 1
        %s644 = scalar_select %p643, %s36, 1
        %s645 = smul.addr %s644, 16
        %s646 = smul.addr %s645, 4
        %s647 = scalar_lea.vmem %s10, %s646
        %p648 = scmp.lt.s32.totalorder %s36, 1
        %s649 = scalar_select %p648, %s36, 1
        %s650 = scalar_lea.vmem %s11, %s649
        %p652 = scmp.eq.s32.totalorder %s36, 0
        // Predicated region
        $region73: #{tpu_custom_call.1} parent=67 // pred_check
          %p653 = pneg %p652
        $region74: #{tpu_custom_call.1} parent=67 // pred_check_branch
          %655 = sbr.rel (%p653) target = $region76
        $region75: #{tpu_custom_call.1} parent=67 // pred_region
          %v656 = vld [vmem:[%s610] sm:$0xff]
          %vm657 = vcmask 261120
          %658 = vst.msk [vmem:[#allocation2] sm:$0xff] %vm657, %v656
          %v659 = vld [vmem:[%s615] sm:$0xff]
          %v660 = vld [vmem:[%s615 + $0x8] sm:$0xff]
          %vm661 = vcmask 392192
          %v662 = vsel %vm661, %v659, 0.0
          %663 = vadd.xlane.f32.xlu0 %v662
          %v664 = vpop.xlane.xlu0 %663
          %v665 = vsel %vm661, %v660, 0.0
          %666 = vadd.xlane.f32.xlu0 %v665
          %v667 = vpop.xlane.xlu0 %666
          %v668 = vrcp.pop 48.0
          %v669 = vmul.f32 %v664, %v668
          %v670 = vmul.f32 %v667, %v668
          %v671 = vsub.f32 %v659, %v669
          %v672 = vsub.f32 %v660, %v670
          %v673 = vmul.f32 %v671, %v671
          %v674 = vmul.f32 %v672, %v672
          %v675 = vsel %vm661, %v673, 0.0
          %676 = vadd.xlane.f32.xlu0 %v675
          %v677 = vpop.xlane.xlu0 %676
          %v678 = vsel %vm661, %v674, 0.0
          %679 = vadd.xlane.f32.xlu0 %v678
          %v680 = vpop.xlane.xlu0 %679
          %v681 = vmul.f32 %v677, %v668
          %v682 = vmul.f32 %v680, %v668
          %v683 = vadd.f32 %v681, 1e-05
          %v684 = vadd.f32 %v682, 1e-05
          %v685 = vrsqrt.pop %v683
          %v686 = vrsqrt.pop %v684
          %v687 = vmul.f32 %v671, %v685
          %v688 = vmul.f32 %v672, %v686
          %v689 = vpack.c.bf16 %v688, %v687
          %v691 = vunpack.c.l.b16 %v689
          %v692 = vunpack.c.h.b16 %v689
          %v693 = vpack.c.b16 %v691, %v691
          %v694 = vpack.c.b16 %v692, %v692
          %vm697 = vcmask 388096
          %698 = vst.msk [vmem:[#allocation3] sm:$0xf] %vm697, %v693
          %699 = vst.msk [vmem:[#allocation3 + $0x4] sm:$0xf] %vm697, %v694
        $region76: #{tpu_custom_call.1} parent=67 // pred_fallthru
          _
        %v700 = vld [vmem:[#allocation2] sm:$0xff]
        %vm701 = vcmask 261120
        %v702 = vsel %vm701, %v700, 0.0
        %703 = vadd.xlane.f32.xlu0 %v702
        %v704 = vpop.xlane.xlu0 %703
        %v705 = vrcp.pop 32.0
        %v706 = vmul.f32 %v704, %v705
        %v707 = vsub.f32 %v700, %v706
        %v708 = vmul.f32 %v707, %v707
        %v709 = vsel %vm701, %v708, 0.0
        %710 = vadd.xlane.f32.xlu0 %v709
        %v711 = vpop.xlane.xlu0 %710
        %v712 = vmul.f32 %v711, %v705
        %v713 = vadd.f32 %v712, 1e-05
        %v714 = vrsqrt.pop %v713
        %v715 = vmul.f32 %v707, %v714
        %v716 = vpack.c.bf16 %v715, %v715
        %v717 = vld [vmem:[%s620] sm:$0xf]
        %v718 = vld [vmem:[%s620 + $0x4] sm:$0xf]
        %v719 = vld [vmem:[%s620 + $0x8] sm:$0xf]
        %v720 = vld [vmem:[%s620 + $0xc] sm:$0xf]
        %v721 = vld [vmem:[%s623] sm:$0x1]
        %v723 = vlaneseq
        %v724 = vshrl.u32 %v723, 7
        %v725 = vsub.s32 0, %v724
        %v726 = vrot.slane %v721, %v725
        %v732 = vunpack.c.l.b16 %v717
        %v733 = vunpack.c.l.b16 %v718
        %v734 = vunpack.c.l.b16 %v719
        %v735 = vunpack.c.l.b16 %v720
        %v736 = vpack.c.b16 %v733, %v732
        %v737 = vpack.c.b16 %v735, %v734
        %v741 = vsel %vm701, %v716, 0
        %743 = vmatprep.subr.bf16.mxu0 0
        %744 = vmatpush1.bf16.msra.mxu0 0
        %745 = vmatprep.subr.bf16.mxu0 0
        %746 = vmatpush1.bf16.msra.mxu0 0
        %747 = vmatprep.subr.bf16.mxu0 0
        %748 = vmatpush1.bf16.msra.mxu0 0
        %749 = vmatprep.subr.bf16.mxu0 0
        %750 = vmatpush1.bf16.msra.mxu0 0
        %751 = vmatprep.subr.bf16.mxu0 0
        %752 = vmatpush1.bf16.msra.mxu0 0
        %753 = vmatprep.subr.bf16.mxu0 0
        %754 = vmatpush1.bf16.msra.mxu0 0
        %755 = vmatprep.subr.bf16.mxu0 0
        %756 = vmatpush1.bf16.msra.mxu0 %v737
        %757 = vmatprep.subr.bf16.mxu0 0
        %758 = vmatpush1.bf16.msra.mxu0 %v736
        %759 = vmatprep.subr.bf16.mxu0 0
        %760 = vmatpush2.bf16.msra.mxu0 0
        %761 = vmatprep.subr.bf16.mxu0 0
        %762 = vmatpush2.bf16.msra.mxu0 0
        %763 = vmatprep.subr.bf16.mxu0 0
        %764 = vmatpush2.bf16.msra.mxu0 0
        %765 = vmatprep.subr.bf16.mxu0 0
        %766 = vmatpush2.bf16.msra.mxu0 0
        %767 = vmatprep.subr.bf16.mxu0 0
        %768 = vmatpush2.bf16.msra.mxu0 0
        %769 = vmatprep.subr.bf16.mxu0 0
        %770 = vmatpush2.bf16.msra.mxu0 0
        %771 = vmatprep.subr.bf16.mxu0 0
        %772 = vmatpush2.bf16.msra.mxu0 0
        %773 = vmatprep.subr.bf16.mxu0 0
        %774 = vmatpush2.bf16.msra.mxu0 0
        %775 = vmatprep.mubr.bf16.mxu0 0
        %776 = vmatmul.mubr.bf16.gmra.mxu0 %v741
        %v777 = vpop.f32.mrf.mxu0
        %v778 = vadd.f32 %v726, %v777
        %v779 = vpop.f32.mrf.mxu0
        %v780 = vpop.f32.mrf.mxu0
        %v781 = vpop.f32.mrf.mxu0
        %782 = vdwg.mxu0
        %v783 = vld [vmem:[#allocation3] sm:$0xf]
        %v784 = vld [vmem:[#allocation3 + $0x4] sm:$0xf]
        %v785 = vld [vmem:[%s628] sm:$0xf]
        %v786 = vld [vmem:[%s628 + $0x4] sm:$0xf]
        %v787 = vld [vmem:[%s628 + $0x8] sm:$0xf]
        %v788 = vld [vmem:[%s628 + $0xc] sm:$0xf]
        %v789 = vld [vmem:[%s628 + $0x10] sm:$0xf]
        %v790 = vld [vmem:[%s628 + $0x14] sm:$0xf]
        %v791 = vld [vmem:[%s631] sm:$0x1]
        %v793 = vlaneseq
        %v794 = vshrl.u32 %v793, 7
        %v795 = vsub.s32 0, %v794
        %v796 = vrot.slane %v791, %v795
        %v800 = vunpack.c.l.b16 %v783
        %v801 = vunpack.c.l.b16 %v784
        %v802 = vpack.c.b16 %v801, %v800
        %v809 = vunpack.c.l.b16 %v785
        %v810 = vunpack.c.l.b16 %v786
        %v811 = vunpack.c.l.b16 %v787
        %v812 = vunpack.c.l.b16 %v788
        %v813 = vunpack.c.l.b16 %v789
        %v814 = vunpack.c.l.b16 %v790
        %v815 = vpack.c.b16 %v810, %v809
        %v816 = vpack.c.b16 %v812, %v811
        %v817 = vpack.c.b16 %v814, %v813
        %vm821 = vcmask 392192
        %v823 = vsel %vm821, %v802, 0
        %825 = vmatprep.subr.bf16.mxu0 0
        %826 = vmatpush1.bf16.msra.mxu0 0
        %827 = vmatprep.subr.bf16.mxu0 0
        %828 = vmatpush1.bf16.msra.mxu0 0
        %829 = vmatprep.subr.bf16.mxu0 0
        %830 = vmatpush1.bf16.msra.mxu0 0
        %831 = vmatprep.subr.bf16.mxu0 0
        %832 = vmatpush1.bf16.msra.mxu0 0
        %833 = vmatprep.subr.bf16.mxu0 0
        %834 = vmatpush1.bf16.msra.mxu0 0
        %835 = vmatprep.subr.bf16.mxu0 0
        %836 = vmatpush1.bf16.msra.mxu0 %v817
        %837 = vmatprep.subr.bf16.mxu0 0
        %838 = vmatpush1.bf16.msra.mxu0 %v816
        %839 = vmatprep.subr.bf16.mxu0 0
        %840 = vmatpush1.bf16.msra.mxu0 %v815
        %841 = vmatprep.subr.bf16.mxu0 0
        %842 = vmatpush2.bf16.msra.mxu0 0
        %843 = vmatprep.subr.bf16.mxu0 0
        %844 = vmatpush2.bf16.msra.mxu0 0
        %845 = vmatprep.subr.bf16.mxu0 0
        %846 = vmatpush2.bf16.msra.mxu0 0
        %847 = vmatprep.subr.bf16.mxu0 0
        %848 = vmatpush2.bf16.msra.mxu0 0
        %849 = vmatprep.subr.bf16.mxu0 0
        %850 = vmatpush2.bf16.msra.mxu0 0
        %851 = vmatprep.subr.bf16.mxu0 0
        %852 = vmatpush2.bf16.msra.mxu0 0
        %853 = vmatprep.subr.bf16.mxu0 0
        %854 = vmatpush2.bf16.msra.mxu0 0
        %855 = vmatprep.subr.bf16.mxu0 0
        %856 = vmatpush2.bf16.msra.mxu0 0
        %857 = vmatprep.mubr.bf16.mxu0 0
        %858 = vmatmul.mubr.bf16.gmra.mxu0 %v823
        %v859 = vpop.f32.mrf.mxu0
        %v860 = vadd.f32 %v796, %v859
        %v861 = vpop.f32.mrf.mxu0
        %v862 = vpop.f32.mrf.mxu0
        %v863 = vadd.f32 %v796, %v862
        %v864 = vpop.f32.mrf.mxu0
        %865 = vdwg.mxu0
        %v866 = vpack.c.bf16 %v863, %v860
        %v867 = vpack.c.bf16 %v778, %v778
        %vm868 = vcmask 64512
        %v870 = vsel %vm868, %v867, 0
        %v873 = vsel %vm868, %v866, 0
        %875 = vmatprep.subr.bf16.mxu0 0
        %876 = vmatpush1.bf16.xpose.msra.mxu0 0
        %877 = vmatprep.subr.bf16.mxu0 0
        %878 = vmatpush1.bf16.xpose.msra.mxu0 0
        %879 = vmatprep.subr.bf16.mxu0 0
        %880 = vmatpush1.bf16.xpose.msra.mxu0 0
        %881 = vmatprep.subr.bf16.mxu0 0
        %882 = vmatpush1.bf16.xpose.msra.mxu0 0
        %883 = vmatprep.subr.bf16.mxu0 0
        %884 = vmatpush1.bf16.xpose.msra.mxu0 0
        %885 = vmatprep.subr.bf16.mxu0 0
        %886 = vmatpush1.bf16.xpose.msra.mxu0 0
        %887 = vmatprep.subr.bf16.mxu0 0
        %888 = vmatpush1.bf16.xpose.msra.mxu0 0
        %889 = vmatprep.subr.bf16.mxu0 0
        %890 = vmatpush1.bf16.xpose.msra.mxu0 %v873
        %891 = vmatprep.subr.bf16.mxu0 0
        %892 = vmatpush2.bf16.xpose.msra.mxu0 0
        %893 = vmatprep.subr.bf16.mxu0 0
        %894 = vmatpush2.bf16.xpose.msra.mxu0 0
        %895 = vmatprep.subr.bf16.mxu0 0
        %896 = vmatpush2.bf16.xpose.msra.mxu0 0
        %897 = vmatprep.subr.bf16.mxu0 0
        %898 = vmatpush2.bf16.xpose.msra.mxu0 0
        %899 = vmatprep.subr.bf16.mxu0 0
        %900 = vmatpush2.bf16.xpose.msra.mxu0 0
        %901 = vmatprep.subr.bf16.mxu0 0
        %902 = vmatpush2.bf16.xpose.msra.mxu0 0
        %903 = vmatprep.subr.bf16.mxu0 0
        %904 = vmatpush2.bf16.xpose.msra.mxu0 0
        %905 = vmatprep.subr.bf16.mxu0 0
        %906 = vmatpush2.bf16.xpose.msra.mxu0 0
        %907 = vmatprep.mubr.bf16.mxu0 0
        %908 = vmatmul.mubr.bf16.gmra.mxu0 %v870
        %v909 = vpop.f32.mrf.mxu0
        %v910 = vadd.f32 0.0, %v909
        %v911 = vpop.f32.mrf.mxu0
        %v912 = vpop.f32.mrf.mxu0
        %v913 = vpop.f32.mrf.mxu0
        %914 = vdwg.mxu0
        %vm915 = vcmask 130048
        %v916 = vsel %vm915, %v910, -inf
        %917 = vmax.xlane.f32.xlu0 %v916
        %v918 = vpop.xlane.xlu0 %917
        %v919 = vsub.f32 %v910, %v918
        %v920 = vmul.f32 %v919, 1.442695
        %v921 = vpow.pop %v920
        %v922 = vsel %vm915, %v921, 0.0
        %923 = vadd.xlane.f32.xlu0 %v922
        %v924 = vpop.xlane.xlu0 %923
        %v925 = vrcp.pop %v924
        %v926 = vmul.f32 %v921, %v925
        %v927 = vpack.c.bf16 %v926, %v926
        %929 = vrot.lane.b32.xlu0 %v866, 96
        %v930 = vpop.permute.xlu0 %929
        %v933 = vsel %vm915, %v927, 0
        %935 = vmatprep.subr.bf16.mxu0 0
        %936 = vmatpush1.bf16.msra.mxu0 0
        %937 = vmatprep.subr.bf16.mxu0 0
        %938 = vmatpush1.bf16.msra.mxu0 0
        %939 = vmatprep.subr.bf16.mxu0 0
        %940 = vmatpush1.bf16.msra.mxu0 0
        %941 = vmatprep.subr.bf16.mxu0 0
        %942 = vmatpush1.bf16.msra.mxu0 0
        %943 = vmatprep.subr.bf16.mxu0 0
        %944 = vmatpush1.bf16.msra.mxu0 0
        %945 = vmatprep.subr.bf16.mxu0 0
        %946 = vmatpush1.bf16.msra.mxu0 0
        %947 = vmatprep.subr.bf16.mxu0 0
        %948 = vmatpush1.bf16.msra.mxu0 0
        %949 = vmatprep.subr.bf16.mxu0 0
        %950 = vmatpush1.bf16.msra.mxu0 %v930
        %951 = vmatprep.subr.bf16.mxu0 0
        %952 = vmatpush2.bf16.msra.mxu0 0
        %953 = vmatprep.subr.bf16.mxu0 0
        %954 = vmatpush2.bf16.msra.mxu0 0
        %955 = vmatprep.subr.bf16.mxu0 0
        %956 = vmatpush2.bf16.msra.mxu0 0
        %957 = vmatprep.subr.bf16.mxu0 0
        %958 = vmatpush2.bf16.msra.mxu0 0
        %959 = vmatprep.subr.bf16.mxu0 0
        %960 = vmatpush2.bf16.msra.mxu0 0
        %961 = vmatprep.subr.bf16.mxu0 0
        %962 = vmatpush2.bf16.msra.mxu0 0
        %963 = vmatprep.subr.bf16.mxu0 0
        %964 = vmatpush2.bf16.msra.mxu0 0
        %965 = vmatprep.subr.bf16.mxu0 0
        %966 = vmatpush2.bf16.msra.mxu0 0
        %967 = vmatprep.mubr.bf16.mxu0 0
        %968 = vmatmul.mubr.bf16.gmra.mxu0 %v933
        %v969 = vpop.f32.mrf.mxu0
        %v970 = vadd.f32 0.0, %v969
        %v971 = vpop.f32.mrf.mxu0
        %v972 = vpop.f32.mrf.mxu0
        %v973 = vpop.f32.mrf.mxu0
        %974 = vdwg.mxu0
        %976 = vrot.lane.b32.xlu0 %v867, 120
        %v977 = vpop.permute.xlu0 %976
        %978 = vrot.lane.b32.xlu0 %v866, 120
        %v979 = vpop.permute.xlu0 %978
        %v981 = vsel %vm868, %v977, 0
        %v984 = vsel %vm868, %v979, 0
        %986 = vmatprep.subr.bf16.mxu0 0
        %987 = vmatpush1.bf16.xpose.msra.mxu0 0
        %988 = vmatprep.subr.bf16.mxu0 0
        %989 = vmatpush1.bf16.xpose.msra.mxu0 0
        %990 = vmatprep.subr.bf16.mxu0 0
        %991 = vmatpush1.bf16.xpose.msra.mxu0 0
        %992 = vmatprep.subr.bf16.mxu0 0
        %993 = vmatpush1.bf16.xpose.msra.mxu0 0
        %994 = vmatprep.subr.bf16.mxu0 0
        %995 = vmatpush1.bf16.xpose.msra.mxu0 0
        %996 = vmatprep.subr.bf16.mxu0 0
        %997 = vmatpush1.bf16.xpose.msra.mxu0 0
        %998 = vmatprep.subr.bf16.mxu0 0
        %999 = vmatpush1.bf16.xpose.msra.mxu0 0
        %1000 = vmatprep.subr.bf16.mxu0 0
        %1001 = vmatpush1.bf16.xpose.msra.mxu0 %v984
        %1002 = vmatprep.subr.bf16.mxu0 0
        %1003 = vmatpush2.bf16.xpose.msra.mxu0 0
        %1004 = vmatprep.subr.bf16.mxu0 0
        %1005 = vmatpush2.bf16.xpose.msra.mxu0 0
        %1006 = vmatprep.subr.bf16.mxu0 0
        %1007 = vmatpush2.bf16.xpose.msra.mxu0 0
        %1008 = vmatprep.subr.bf16.mxu0 0
        %1009 = vmatpush2.bf16.xpose.msra.mxu0 0
        %1010 = vmatprep.subr.bf16.mxu0 0
        %1011 = vmatpush2.bf16.xpose.msra.mxu0 0
        %1012 = vmatprep.subr.bf16.mxu0 0
        %1013 = vmatpush2.bf16.xpose.msra.mxu0 0
        %1014 = vmatprep.subr.bf16.mxu0 0
        %1015 = vmatpush2.bf16.xpose.msra.mxu0 0
        %1016 = vmatprep.subr.bf16.mxu0 0
        %1017 = vmatpush2.bf16.xpose.msra.mxu0 0
        %1018 = vmatprep.mubr.bf16.mxu0 0
        %1019 = vmatmul.mubr.bf16.gmra.mxu0 %v981
        %v1020 = vpop.f32.mrf.mxu0
        %v1021 = vadd.f32 0.0, %v1020
        %v1022 = vpop.f32.mrf.mxu0
        %v1023 = vpop.f32.mrf.mxu0
        %v1024 = vpop.f32.mrf.mxu0
        %1025 = vdwg.mxu0
        %v1026 = vsel %vm915, %v1021, -inf
        %1027 = vmax.xlane.f32.xlu0 %v1026
        %v1028 = vpop.xlane.xlu0 %1027
        %v1029 = vsub.f32 %v1021, %v1028
        %v1030 = vmul.f32 %v1029, 1.442695
        %v1031 = vpow.pop %v1030
        %v1032 = vsel %vm915, %v1031, 0.0
        %1033 = vadd.xlane.f32.xlu0 %v1032
        %v1034 = vpop.xlane.xlu0 %1033
        %v1035 = vrcp.pop %v1034
        %v1036 = vmul.f32 %v1031, %v1035
        %v1037 = vpack.c.bf16 %v1036, %v1036
        %1038 = vrot.lane.b32.xlu0 %v866, 88
        %v1039 = vpop.permute.xlu0 %1038
        %v1042 = vsel %vm915, %v1037, 0
        %1044 = vmatprep.subr.bf16.mxu0 0
        %1045 = vmatpush1.bf16.msra.mxu0 0
        %1046 = vmatprep.subr.bf16.mxu0 0
        %1047 = vmatpush1.bf16.msra.mxu0 0
        %1048 = vmatprep.subr.bf16.mxu0 0
        %1049 = vmatpush1.bf16.msra.mxu0 0
        %1050 = vmatprep.subr.bf16.mxu0 0
        %1051 = vmatpush1.bf16.msra.mxu0 0
        %1052 = vmatprep.subr.bf16.mxu0 0
        %1053 = vmatpush1.bf16.msra.mxu0 0
        %1054 = vmatprep.subr.bf16.mxu0 0
        %1055 = vmatpush1.bf16.msra.mxu0 0
        %1056 = vmatprep.subr.bf16.mxu0 0
        %1057 = vmatpush1.bf16.msra.mxu0 0
        %1058 = vmatprep.subr.bf16.mxu0 0
        %1059 = vmatpush1.bf16.msra.mxu0 %v1039
        %1060 = vmatprep.subr.bf16.mxu0 0
        %1061 = vmatpush2.bf16.msra.mxu0 0
        %1062 = vmatprep.subr.bf16.mxu0 0
        %1063 = vmatpush2.bf16.msra.mxu0 0
        %1064 = vmatprep.subr.bf16.mxu0 0
        %1065 = vmatpush2.bf16.msra.mxu0 0
        %1066 = vmatprep.subr.bf16.mxu0 0
        %1067 = vmatpush2.bf16.msra.mxu0 0
        %1068 = vmatprep.subr.bf16.mxu0 0
        %1069 = vmatpush2.bf16.msra.mxu0 0
        %1070 = vmatprep.subr.bf16.mxu0 0
        %1071 = vmatpush2.bf16.msra.mxu0 0
        %1072 = vmatprep.subr.bf16.mxu0 0
        %1073 = vmatpush2.bf16.msra.mxu0 0
        %1074 = vmatprep.subr.bf16.mxu0 0
        %1075 = vmatpush2.bf16.msra.mxu0 0
        %1076 = vmatprep.mubr.bf16.mxu0 0
        %1077 = vmatmul.mubr.bf16.gmra.mxu0 %v1042
        %v1078 = vpop.f32.mrf.mxu0
        %v1079 = vadd.f32 0.0, %v1078
        %v1080 = vpop.f32.mrf.mxu0
        %v1081 = vpop.f32.mrf.mxu0
        %v1082 = vpop.f32.mrf.mxu0
        %1083 = vdwg.mxu0
        %1084 = vrot.lane.b32.xlu0 %v867, 112
        %v1085 = vpop.permute.xlu0 %1084
        %1086 = vrot.lane.b32.xlu0 %v866, 112
        %v1087 = vpop.permute.xlu0 %1086
        %v1089 = vsel %vm868, %v1085, 0
        %v1092 = vsel %vm868, %v1087, 0
        %1094 = vmatprep.subr.bf16.mxu0 0
        %1095 = vmatpush1.bf16.xpose.msra.mxu0 0
        %1096 = vmatprep.subr.bf16.mxu0 0
        %1097 = vmatpush1.bf16.xpose.msra.mxu0 0
        %1098 = vmatprep.subr.bf16.mxu0 0
        %1099 = vmatpush1.bf16.xpose.msra.mxu0 0
        %1100 = vmatprep.subr.bf16.mxu0 0
        %1101 = vmatpush1.bf16.xpose.msra.mxu0 0
        %1102 = vmatprep.subr.bf16.mxu0 0
        %1103 = vmatpush1.bf16.xpose.msra.mxu0 0
        %1104 = vmatprep.subr.bf16.mxu0 0
        %1105 = vmatpush1.bf16.xpose.msra.mxu0 0
        %1106 = vmatprep.subr.bf16.mxu0 0
        %1107 = vmatpush1.bf16.xpose.msra.mxu0 0
        %1108 = vmatprep.subr.bf16.mxu0 0
        %1109 = vmatpush1.bf16.xpose.msra.mxu0 %v1092
        %1110 = vmatprep.subr.bf16.mxu0 0
        %1111 = vmatpush2.bf16.xpose.msra.mxu0 0
        %1112 = vmatprep.subr.bf16.mxu0 0
        %1113 = vmatpush2.bf16.xpose.msra.mxu0 0
        %1114 = vmatprep.subr.bf16.mxu0 0
        %1115 = vmatpush2.bf16.xpose.msra.mxu0 0
        %1116 = vmatprep.subr.bf16.mxu0 0
        %1117 = vmatpush2.bf16.xpose.msra.mxu0 0
        %1118 = vmatprep.subr.bf16.mxu0 0
        %1119 = vmatpush2.bf16.xpose.msra.mxu0 0
        %1120 = vmatprep.subr.bf16.mxu0 0
        %1121 = vmatpush2.bf16.xpose.msra.mxu0 0
        %1122 = vmatprep.subr.bf16.mxu0 0
        %1123 = vmatpush2.bf16.xpose.msra.mxu0 0
        %1124 = vmatprep.subr.bf16.mxu0 0
        %1125 = vmatpush2.bf16.xpose.msra.mxu0 0
        %1126 = vmatprep.mubr.bf16.mxu0 0
        %1127 = vmatmul.mubr.bf16.gmra.mxu0 %v1089
        %v1128 = vpop.f32.mrf.mxu0
        %v1129 = vadd.f32 0.0, %v1128
        %v1130 = vpop.f32.mrf.mxu0
        %v1131 = vpop.f32.mrf.mxu0
        %v1132 = vpop.f32.mrf.mxu0
        %1133 = vdwg.mxu0
        %v1134 = vsel %vm915, %v1129, -inf
        %1135 = vmax.xlane.f32.xlu0 %v1134
        %v1136 = vpop.xlane.xlu0 %1135
        %v1137 = vsub.f32 %v1129, %v1136
        %v1138 = vmul.f32 %v1137, 1.442695
        %v1139 = vpow.pop %v1138
        %v1140 = vsel %vm915, %v1139, 0.0
        %1141 = vadd.xlane.f32.xlu0 %v1140
        %v1142 = vpop.xlane.xlu0 %1141
        %v1143 = vrcp.pop %v1142
        %v1144 = vmul.f32 %v1139, %v1143
        %v1145 = vpack.c.bf16 %v1144, %v1144
        %1146 = vrot.lane.b32.xlu0 %v866, 80
        %v1147 = vpop.permute.xlu0 %1146
        %v1150 = vsel %vm915, %v1145, 0
        %1152 = vmatprep.subr.bf16.mxu0 0
        %1153 = vmatpush1.bf16.msra.mxu0 0
        %1154 = vmatprep.subr.bf16.mxu0 0
        %1155 = vmatpush1.bf16.msra.mxu0 0
        %1156 = vmatprep.subr.bf16.mxu0 0
        %1157 = vmatpush1.bf16.msra.mxu0 0
        %1158 = vmatprep.subr.bf16.mxu0 0
        %1159 = vmatpush1.bf16.msra.mxu0 0
        %1160 = vmatprep.subr.bf16.mxu0 0
        %1161 = vmatpush1.bf16.msra.mxu0 0
        %1162 = vmatprep.subr.bf16.mxu0 0
        %1163 = vmatpush1.bf16.msra.mxu0 0
        %1164 = vmatprep.subr.bf16.mxu0 0
        %1165 = vmatpush1.bf16.msra.mxu0 0
        %1166 = vmatprep.subr.bf16.mxu0 0
        %1167 = vmatpush1.bf16.msra.mxu0 %v1147
        %1168 = vmatprep.subr.bf16.mxu0 0
        %1169 = vmatpush2.bf16.msra.mxu0 0
        %1170 = vmatprep.subr.bf16.mxu0 0
        %1171 = vmatpush2.bf16.msra.mxu0 0
        %1172 = vmatprep.subr.bf16.mxu0 0
        %1173 = vmatpush2.bf16.msra.mxu0 0
        %1174 = vmatprep.subr.bf16.mxu0 0
        %1175 = vmatpush2.bf16.msra.mxu0 0
        %1176 = vmatprep.subr.bf16.mxu0 0
        %1177 = vmatpush2.bf16.msra.mxu0 0
        %1178 = vmatprep.subr.bf16.mxu0 0
        %1179 = vmatpush2.bf16.msra.mxu0 0
        %1180 = vmatprep.subr.bf16.mxu0 0
        %1181 = vmatpush2.bf16.msra.mxu0 0
        %1182 = vmatprep.subr.bf16.mxu0 0
        %1183 = vmatpush2.bf16.msra.mxu0 0
        %1184 = vmatprep.mubr.bf16.mxu0 0
        %1185 = vmatmul.mubr.bf16.gmra.mxu0 %v1150
        %v1186 = vpop.f32.mrf.mxu0
        %v1187 = vadd.f32 0.0, %v1186
        %v1188 = vpop.f32.mrf.mxu0
        %v1189 = vpop.f32.mrf.mxu0
        %v1190 = vpop.f32.mrf.mxu0
        %1191 = vdwg.mxu0
        %1192 = vrot.lane.b32.xlu0 %v867, 104
        %v1193 = vpop.permute.xlu0 %1192
        %1194 = vrot.lane.b32.xlu0 %v866, 104
        %v1195 = vpop.permute.xlu0 %1194
        %v1197 = vsel %vm868, %v1193, 0
        %v1200 = vsel %vm868, %v1195, 0
        %1202 = vmatprep.subr.bf16.mxu0 0
        %1203 = vmatpush1.bf16.xpose.msra.mxu0 0
        %1204 = vmatprep.subr.bf16.mxu0 0
        %1205 = vmatpush1.bf16.xpose.msra.mxu0 0
        %1206 = vmatprep.subr.bf16.mxu0 0
        %1207 = vmatpush1.bf16.xpose.msra.mxu0 0
        %1208 = vmatprep.subr.bf16.mxu0 0
        %1209 = vmatpush1.bf16.xpose.msra.mxu0 0
        %1210 = vmatprep.subr.bf16.mxu0 0
        %1211 = vmatpush1.bf16.xpose.msra.mxu0 0
        %1212 = vmatprep.subr.bf16.mxu0 0
        %1213 = vmatpush1.bf16.xpose.msra.mxu0 0
        %1214 = vmatprep.subr.bf16.mxu0 0
        %1215 = vmatpush1.bf16.xpose.msra.mxu0 0
        %1216 = vmatprep.subr.bf16.mxu0 0
        %1217 = vmatpush1.bf16.xpose.msra.mxu0 %v1200
        %1218 = vmatprep.subr.bf16.mxu0 0
        %1219 = vmatpush2.bf16.xpose.msra.mxu0 0
        %1220 = vmatprep.subr.bf16.mxu0 0
        %1221 = vmatpush2.bf16.xpose.msra.mxu0 0
        %1222 = vmatprep.subr.bf16.mxu0 0
        %1223 = vmatpush2.bf16.xpose.msra.mxu0 0
        %1224 = vmatprep.subr.bf16.mxu0 0
        %1225 = vmatpush2.bf16.xpose.msra.mxu0 0
        %1226 = vmatprep.subr.bf16.mxu0 0
        %1227 = vmatpush2.bf16.xpose.msra.mxu0 0
        %1228 = vmatprep.subr.bf16.mxu0 0
        %1229 = vmatpush2.bf16.xpose.msra.mxu0 0
        %1230 = vmatprep.subr.bf16.mxu0 0
        %1231 = vmatpush2.bf16.xpose.msra.mxu0 0
        %1232 = vmatprep.subr.bf16.mxu0 0
        %1233 = vmatpush2.bf16.xpose.msra.mxu0 0
        %1234 = vmatprep.mubr.bf16.mxu0 0
        %1235 = vmatmul.mubr.bf16.gmra.mxu0 %v1197
        %v1236 = vpop.f32.mrf.mxu0
        %v1237 = vadd.f32 0.0, %v1236
        %v1238 = vpop.f32.mrf.mxu0
        %v1239 = vpop.f32.mrf.mxu0
        %v1240 = vpop.f32.mrf.mxu0
        %1241 = vdwg.mxu0
        %v1242 = vsel %vm915, %v1237, -inf
        %1243 = vmax.xlane.f32.xlu0 %v1242
        %v1244 = vpop.xlane.xlu0 %1243
        %v1245 = vsub.f32 %v1237, %v1244
        %v1246 = vmul.f32 %v1245, 1.442695
        %v1247 = vpow.pop %v1246
        %v1248 = vsel %vm915, %v1247, 0.0
        %1249 = vadd.xlane.f32.xlu0 %v1248
        %v1250 = vpop.xlane.xlu0 %1249
        %v1251 = vrcp.pop %v1250
        %v1252 = vmul.f32 %v1247, %v1251
        %v1253 = vpack.c.bf16 %v1252, %v1252
        %1254 = vrot.lane.b32.xlu0 %v866, 72
        %v1255 = vpop.permute.xlu0 %1254
        %v1258 = vsel %vm915, %v1253, 0
        %1260 = vmatprep.subr.bf16.mxu0 0
        %1261 = vmatpush1.bf16.msra.mxu0 0
        %1262 = vmatprep.subr.bf16.mxu0 0
        %1263 = vmatpush1.bf16.msra.mxu0 0
        %1264 = vmatprep.subr.bf16.mxu0 0
        %1265 = vmatpush1.bf16.msra.mxu0 0
        %1266 = vmatprep.subr.bf16.mxu0 0
        %1267 = vmatpush1.bf16.msra.mxu0 0
        %1268 = vmatprep.subr.bf16.mxu0 0
        %1269 = vmatpush1.bf16.msra.mxu0 0
        %1270 = vmatprep.subr.bf16.mxu0 0
        %1271 = vmatpush1.bf16.msra.mxu0 0
        %1272 = vmatprep.subr.bf16.mxu0 0
        %1273 = vmatpush1.bf16.msra.mxu0 0
        %1274 = vmatprep.subr.bf16.mxu0 0
        %1275 = vmatpush1.bf16.msra.mxu0 %v1255
        %1276 = vmatprep.subr.bf16.mxu0 0
        %1277 = vmatpush2.bf16.msra.mxu0 0
        %1278 = vmatprep.subr.bf16.mxu0 0
        %1279 = vmatpush2.bf16.msra.mxu0 0
        %1280 = vmatprep.subr.bf16.mxu0 0
        %1281 = vmatpush2.bf16.msra.mxu0 0
        %1282 = vmatprep.subr.bf16.mxu0 0
        %1283 = vmatpush2.bf16.msra.mxu0 0
        %1284 = vmatprep.subr.bf16.mxu0 0
        %1285 = vmatpush2.bf16.msra.mxu0 0
        %1286 = vmatprep.subr.bf16.mxu0 0
        %1287 = vmatpush2.bf16.msra.mxu0 0
        %1288 = vmatprep.subr.bf16.mxu0 0
        %1289 = vmatpush2.bf16.msra.mxu0 0
        %1290 = vmatprep.subr.bf16.mxu0 0
        %1291 = vmatpush2.bf16.msra.mxu0 0
        %1292 = vmatprep.mubr.bf16.mxu0 0
        %1293 = vmatmul.mubr.bf16.gmra.mxu0 %v1258
        %v1294 = vpop.f32.mrf.mxu0
        %v1295 = vadd.f32 0.0, %v1294
        %v1296 = vpop.f32.mrf.mxu0
        %v1297 = vpop.f32.mrf.mxu0
        %v1298 = vpop.f32.mrf.mxu0
        %1299 = vdwg.mxu0
        %1301 = vrot.lane.b32.xlu0 %v1079, 8
        %v1302 = vpop.permute.xlu0 %1301
        %1305 = vrot.lane.b32.xlu0 %v1187, 16
        %v1306 = vpop.permute.xlu0 %1305
        %1309 = vrot.lane.b32.xlu0 %v1295, 24
        %v1310 = vpop.permute.xlu0 %1309
        %v1312 = vsel %vm868, %v970, %v1302
        %v1313 = vsel %vm915, %v1312, %v1306
        %vm1314 = vcmask 195584
        %v1315 = vsel %vm1314, %v1313, %v1310
        %v1316 = vpack.c.bf16 %v1315, %v1315
        %v1317 = vld [vmem:[%s636] sm:$0xf]
        %v1318 = vld [vmem:[%s636 + $0x4] sm:$0xf]
        %v1319 = vld [vmem:[%s636 + $0x8] sm:$0xf]
        %v1320 = vld [vmem:[%s636 + $0xc] sm:$0xf]
        %v1321 = vld [vmem:[%s639] sm:$0x1]
        %v1323 = vlaneseq
        %v1324 = vshrl.u32 %v1323, 7
        %v1325 = vsub.s32 0, %v1324
        %v1326 = vrot.slane %v1321, %v1325
        %v1332 = vunpack.c.l.b16 %v1317
        %v1333 = vunpack.c.l.b16 %v1318
        %v1334 = vunpack.c.l.b16 %v1319
        %v1335 = vunpack.c.l.b16 %v1320
        %v1336 = vpack.c.b16 %v1333, %v1332
        %v1337 = vpack.c.b16 %v1335, %v1334
        %v1341 = vsel %vm701, %v1316, 0
        %1343 = vmatprep.subr.bf16.mxu0 0
        %1344 = vmatpush1.bf16.msra.mxu0 0
        %1345 = vmatprep.subr.bf16.mxu0 0
        %1346 = vmatpush1.bf16.msra.mxu0 0
        %1347 = vmatprep.subr.bf16.mxu0 0
        %1348 = vmatpush1.bf16.msra.mxu0 0
        %1349 = vmatprep.subr.bf16.mxu0 0
        %1350 = vmatpush1.bf16.msra.mxu0 0
        %1351 = vmatprep.subr.bf16.mxu0 0
        %1352 = vmatpush1.bf16.msra.mxu0 0
        %1353 = vmatprep.subr.bf16.mxu0 0
        %1354 = vmatpush1.bf16.msra.mxu0 0
        %1355 = vmatprep.subr.bf16.mxu0 0
        %1356 = vmatpush1.bf16.msra.mxu0 %v1337
        %1357 = vmatprep.subr.bf16.mxu0 0
        %1358 = vmatpush1.bf16.msra.mxu0 %v1336
        %1359 = vmatprep.subr.bf16.mxu0 0
        %1360 = vmatpush2.bf16.msra.mxu0 0
        %1361 = vmatprep.subr.bf16.mxu0 0
        %1362 = vmatpush2.bf16.msra.mxu0 0
        %1363 = vmatprep.subr.bf16.mxu0 0
        %1364 = vmatpush2.bf16.msra.mxu0 0
        %1365 = vmatprep.subr.bf16.mxu0 0
        %1366 = vmatpush2.bf16.msra.mxu0 0
        %1367 = vmatprep.subr.bf16.mxu0 0
        %1368 = vmatpush2.bf16.msra.mxu0 0
        %1369 = vmatprep.subr.bf16.mxu0 0
        %1370 = vmatpush2.bf16.msra.mxu0 0
        %1371 = vmatprep.subr.bf16.mxu0 0
        %1372 = vmatpush2.bf16.msra.mxu0 0
        %1373 = vmatprep.subr.bf16.mxu0 0
        %1374 = vmatpush2.bf16.msra.mxu0 0
        %1375 = vmatprep.mubr.bf16.mxu0 0
        %1376 = vmatmul.mubr.bf16.gmra.mxu0 %v1341
        %v1377 = vpop.f32.mrf.mxu0
        %v1378 = vadd.f32 %v1326, %v1377
        %v1379 = vpop.f32.mrf.mxu0
        %v1380 = vpop.f32.mrf.mxu0
        %v1381 = vpop.f32.mrf.mxu0
        %1382 = vdwg.mxu0
        %v1383 = vadd.f32 %v700, %v1378
        %v1384 = vsel %vm701, %v1383, 0.0
        %1385 = vadd.xlane.f32.xlu0 %v1384
        %v1386 = vpop.xlane.xlu0 %1385
        %v1387 = vmul.f32 %v1386, %v705
        %v1388 = vsub.f32 %v1383, %v1387
        %v1389 = vmul.f32 %v1388, %v1388
        %v1390 = vsel %vm701, %v1389, 0.0
        %1391 = vadd.xlane.f32.xlu0 %v1390
        %v1392 = vpop.xlane.xlu0 %1391
        %v1393 = vmul.f32 %v1392, %v705
        %v1394 = vadd.f32 %v1393, 1e-05
        %v1395 = vrsqrt.pop %v1394
        %v1396 = vmul.f32 %v1388, %v1395
        %v1397 = vpack.c.bf16 %v1396, %v1396
        %v1398 = vld [vmem:[%s516] sm:$0xf]
        %v1399 = vld [vmem:[%s516 + $0x4] sm:$0xf]
        %v1400 = vld [vmem:[%s516 + $0x8] sm:$0xf]
        %v1401 = vld [vmem:[%s516 + $0xc] sm:$0xf]
        %v1402 = vld [vmem:[%s642] sm:$0x1]
        %v1404 = vlaneseq
        %v1405 = vshrl.u32 %v1404, 7
        %v1406 = vsub.s32 0, %v1405
        %v1407 = vrot.slane %v1402, %v1406
        %v1413 = vunpack.c.l.b16 %v1398
        %v1414 = vunpack.c.l.b16 %v1399
        %v1415 = vunpack.c.l.b16 %v1400
        %v1416 = vunpack.c.l.b16 %v1401
        %v1417 = vpack.c.b16 %v1414, %v1413
        %v1418 = vpack.c.b16 %v1416, %v1415
        %v1422 = vsel %vm701, %v1397, 0
        %1424 = vmatprep.subr.bf16.mxu0 0
        %1425 = vmatpush1.bf16.msra.mxu0 0
        %1426 = vmatprep.subr.bf16.mxu0 0
        %1427 = vmatpush1.bf16.msra.mxu0 0
        %1428 = vmatprep.subr.bf16.mxu0 0
        %1429 = vmatpush1.bf16.msra.mxu0 0
        %1430 = vmatprep.subr.bf16.mxu0 0
        %1431 = vmatpush1.bf16.msra.mxu0 0
        %1432 = vmatprep.subr.bf16.mxu0 0
        %1433 = vmatpush1.bf16.msra.mxu0 0
        %1434 = vmatprep.subr.bf16.mxu0 0
        %1435 = vmatpush1.bf16.msra.mxu0 0
        %1436 = vmatprep.subr.bf16.mxu0 0
        %1437 = vmatpush1.bf16.msra.mxu0 %v1418
        %1438 = vmatprep.subr.bf16.mxu0 0
        %1439 = vmatpush1.bf16.msra.mxu0 %v1417
        %1440 = vmatprep.subr.bf16.mxu0 0
        %1441 = vmatpush2.bf16.msra.mxu0 0
        %1442 = vmatprep.subr.bf16.mxu0 0
        %1443 = vmatpush2.bf16.msra.mxu0 0
        %1444 = vmatprep.subr.bf16.mxu0 0
        %1445 = vmatpush2.bf16.msra.mxu0 0
        %1446 = vmatprep.subr.bf16.mxu0 0
        %1447 = vmatpush2.bf16.msra.mxu0 0
        %1448 = vmatprep.subr.bf16.mxu0 0
        %1449 = vmatpush2.bf16.msra.mxu0 0
        %1450 = vmatprep.subr.bf16.mxu0 0
        %1451 = vmatpush2.bf16.msra.mxu0 0
        %1452 = vmatprep.subr.bf16.mxu0 0
        %1453 = vmatpush2.bf16.msra.mxu0 0
        %1454 = vmatprep.subr.bf16.mxu0 0
        %1455 = vmatpush2.bf16.msra.mxu0 0
        %1456 = vmatprep.mubr.bf16.mxu0 0
        %1457 = vmatmul.mubr.bf16.gmra.mxu0 %v1422
        %v1458 = vpop.f32.mrf.mxu0
        %v1459 = vadd.f32 %v1407, %v1458
        %v1460 = vpop.f32.mrf.mxu0
        %v1461 = vpop.f32.mrf.mxu0
        %v1462 = vpop.f32.mrf.mxu0
        %1463 = vdwg.mxu0
        %v1464 = vmul.f32 %v1459, 0.5
        %v1465 = vmul.f32 %v1459, 0.70710677
        %v1466 = vmax.f32 %v1465, -4.0
        %v1467 = vmin.f32 %v1466, 4.0
        %v1468 = vmul.f32 %v1467, %v1467
        %v1469 = vmul.f32 %v1468, -2.7261424e-10
        %v1470 = vadd.f32 %v1469, 2.7706815e-08
        %v1471 = vmul.f32 %v1470, %v1468
        %v1472 = vadd.f32 %v1471, -2.101024e-06
        %v1473 = vmul.f32 %v1472, %v1468
        %v1474 = vadd.f32 %v1473, -5.6925062e-05
        %v1475 = vmul.f32 %v1474, %v1468
        %v1476 = vadd.f32 %v1475, -0.00073499064
        %v1477 = vmul.f32 %v1476, %v1468
        %v1478 = vadd.f32 %v1477, -0.0029546
        %v1479 = vmul.f32 %v1478, %v1468
        %v1480 = vadd.f32 %v1479, -0.016096033
        %v1481 = vmul.f32 %v1480, %v1467
        %v1482 = vmul.f32 %v1468, -1.45660715e-05
        %v1483 = vadd.f32 %v1482, -0.00021337405
        %v1484 = vmul.f32 %v1483, %v1468
        %v1485 = vadd.f32 %v1484, -0.001682827
        %v1486 = vmul.f32 %v1485, %v1468
        %v1487 = vadd.f32 %v1486, -0.0073733293
        %v1488 = vmul.f32 %v1487, %v1468
        %v1489 = vadd.f32 %v1488, -0.014264739
        %v1490 = vrcp.pop %v1489
        %v1491 = vmul.f32 %v1481, %v1490
        %v1492 = vadd.f32 %v1491, 1.0
        %v1493 = vmul.f32 %v1464, %v1492
        %v1494 = vpack.c.bf16 %v1493, %v1493
        %v1495 = vld [vmem:[%s647] sm:$0xf]
        %v1496 = vld [vmem:[%s647 + $0x4] sm:$0xf]
        %v1497 = vld [vmem:[%s647 + $0x8] sm:$0xf]
        %v1498 = vld [vmem:[%s647 + $0xc] sm:$0xf]
        %v1499 = vld [vmem:[%s647 + $0x10] sm:$0xf]
        %v1500 = vld [vmem:[%s647 + $0x14] sm:$0xf]
        %v1501 = vld [vmem:[%s647 + $0x18] sm:$0xf]
        %v1502 = vld [vmem:[%s647 + $0x1c] sm:$0xf]
        %v1503 = vld [vmem:[%s647 + $0x20] sm:$0xf]
        %v1504 = vld [vmem:[%s647 + $0x24] sm:$0xf]
        %v1505 = vld [vmem:[%s647 + $0x28] sm:$0xf]
        %v1506 = vld [vmem:[%s647 + $0x2c] sm:$0xf]
        %v1507 = vld [vmem:[%s647 + $0x30] sm:$0xf]
        %v1508 = vld [vmem:[%s647 + $0x34] sm:$0xf]
        %v1509 = vld [vmem:[%s647 + $0x38] sm:$0xf]
        %v1510 = vld [vmem:[%s647 + $0x3c] sm:$0xf]
        %v1511 = vld [vmem:[%s650] sm:$0x1]
        %v1513 = vlaneseq
        %v1514 = vshrl.u32 %v1513, 7
        %v1515 = vsub.s32 0, %v1514
        %v1516 = vrot.slane %v1511, %v1515
        %v1534 = vunpack.c.l.b16 %v1495
        %v1535 = vunpack.c.l.b16 %v1496
        %v1536 = vunpack.c.l.b16 %v1497
        %v1537 = vunpack.c.l.b16 %v1498
        %v1538 = vunpack.c.l.b16 %v1499
        %v1539 = vunpack.c.l.b16 %v1500
        %v1540 = vunpack.c.l.b16 %v1501
        %v1541 = vunpack.c.l.b16 %v1502
        %v1542 = vunpack.c.l.b16 %v1503
        %v1543 = vunpack.c.l.b16 %v1504
        %v1544 = vunpack.c.l.b16 %v1505
        %v1545 = vunpack.c.l.b16 %v1506
        %v1546 = vunpack.c.l.b16 %v1507
        %v1547 = vunpack.c.l.b16 %v1508
        %v1548 = vunpack.c.l.b16 %v1509
        %v1549 = vunpack.c.l.b16 %v1510
        %v1550 = vpack.c.b16 %v1535, %v1534
        %v1551 = vpack.c.b16 %v1537, %v1536
        %v1552 = vpack.c.b16 %v1539, %v1538
        %v1553 = vpack.c.b16 %v1541, %v1540
        %v1554 = vpack.c.b16 %v1543, %v1542
        %v1555 = vpack.c.b16 %v1545, %v1544
        %v1556 = vpack.c.b16 %v1547, %v1546
        %v1557 = vpack.c.b16 %v1549, %v1548
        %1566 = vmatprep.subr.bf16.mxu0 0
        %1567 = vmatpush1.bf16.msra.mxu0 %v1557
        %1568 = vmatprep.subr.bf16.mxu0 0
        %1569 = vmatpush1.bf16.msra.mxu0 %v1556
        %1570 = vmatprep.subr.bf16.mxu0 0
        %1571 = vmatpush1.bf16.msra.mxu0 %v1555
        %1572 = vmatprep.subr.bf16.mxu0 0
        %1573 = vmatpush1.bf16.msra.mxu0 %v1554
        %1574 = vmatprep.subr.bf16.mxu0 0
        %1575 = vmatpush1.bf16.msra.mxu0 %v1553
        %1576 = vmatprep.subr.bf16.mxu0 0
        %1577 = vmatpush1.bf16.msra.mxu0 %v1552
        %1578 = vmatprep.subr.bf16.mxu0 0
        %1579 = vmatpush1.bf16.msra.mxu0 %v1551
        %1580 = vmatprep.subr.bf16.mxu0 0
        %1581 = vmatpush1.bf16.msra.mxu0 %v1550
        %1582 = vmatprep.subr.bf16.mxu0 0
        %1583 = vmatpush2.bf16.msra.mxu0 0
        %1584 = vmatprep.subr.bf16.mxu0 0
        %1585 = vmatpush2.bf16.msra.mxu0 0
        %1586 = vmatprep.subr.bf16.mxu0 0
        %1587 = vmatpush2.bf16.msra.mxu0 0
        %1588 = vmatprep.subr.bf16.mxu0 0
        %1589 = vmatpush2.bf16.msra.mxu0 0
        %1590 = vmatprep.subr.bf16.mxu0 0
        %1591 = vmatpush2.bf16.msra.mxu0 0
        %1592 = vmatprep.subr.bf16.mxu0 0
        %1593 = vmatpush2.bf16.msra.mxu0 0
        %1594 = vmatprep.subr.bf16.mxu0 0
        %1595 = vmatpush2.bf16.msra.mxu0 0
        %1596 = vmatprep.subr.bf16.mxu0 0
        %1597 = vmatpush2.bf16.msra.mxu0 0
        %1598 = vmatprep.mubr.bf16.mxu0 0
        %1599 = vmatmul.mubr.bf16.gmra.mxu0 %v1494
        %v1600 = vpop.f32.mrf.mxu0
        %v1601 = vadd.f32 %v1516, %v1600
        %v1602 = vpop.f32.mrf.mxu0
        %v1603 = vpop.f32.mrf.mxu0
        %v1604 = vpop.f32.mrf.mxu0
        %1605 = vdwg.mxu0
        %v1606 = vadd.f32 %v1383, %v1601
        %1607 = vst.msk [vmem:[#allocation2] sm:$0xff] %vm701, %v1606
        %p1608 = scmp.eq.s32.totalorder %s36, 1
        // Predicated region
        $region77: #{tpu_custom_call.1} parent=67 // pred_check
          %p1609 = pneg %p1608
        $region78: #{tpu_custom_call.1} parent=67 // pred_check_branch
          %1611 = sbr.rel (%p1609) target = $region80
        $region79: #{tpu_custom_call.1} parent=67 // pred_region
          %1612 = vst.msk [vmem:[%s603] sm:$0xff] %vm701, %v1606
        $region80: #{tpu_custom_call.1} parent=67 // pred_fallthru
          _
        %s1613 = sand.u32 %s372, 1
        %s1614 = scalar_lea.sflag [#allocation6], %s1613
        %s1615 = sand.u32 %s372, 1
        %s1616 = smul.addr %s1615, 8
        %s1617 = scalar_lea.vmem [#allocation7], %s1616
        // Predicated region
        $region81: #{tpu_custom_call.1} parent=67 // pred_check
          %p1618 = pneg %p382
        $region82: #{tpu_custom_call.1} parent=67 // pred_check_branch
          %1620 = sbr.rel (%p1618) target = $region84
        $region83: #{tpu_custom_call.1} parent=67 // pred_region
          %s1622 = ssub.s32 128, 128
          %1623 = vsyncadd %s1614, %s1622
          %s1624 = sadd.s32 %s35, %s34
          %s1625 = smul.addr %s1624, 128
          %s1626 = scalar_lea.hbm %s12, %s1625
          %s1628 = sshll.u32 %s1617, 4
          %s1629 = int_to_ptr.vmem [resolvable:$true] %s1628
          %1631 = dma.vmem_to_hbm [thread:$0]  %s1629, 128, %s1626, %s1614
        $region84: #{tpu_custom_call.1} parent=67 // pred_fallthru
          _
      $region68: #{tpu_custom_call.1} parent=5 // pred_fallthru
        _
      %p1632 = scmp.le.s32.totalorder 2, %s24
      // Predicated region
      $region85: #{tpu_custom_call.1} parent=5 // pred_check
        %p1633 = pneg %p1632
      $region86: #{tpu_custom_call.1} parent=5 // pred_check_branch
        %1635 = sbr.rel (%p1633) target = $region88
      $region87: #{tpu_custom_call.1} parent=5 // pred_region
        %s1636 = ssub.s32 %s24, 2
        // Predicated region
        $region89: #{tpu_custom_call.1} parent=87 // pred_check
          %p1637 = pneg %p388
        $region90: #{tpu_custom_call.1} parent=87 // pred_check_branch
          %1639 = sbr.rel (%p1637) target = $region92
        $region91: #{tpu_custom_call.1} parent=87 // pred_region
          %s1640 = sand.u32 %s373, 1
          %s1641 = scalar_lea.sflag [#allocation6], %s1640
          %s1642 = sand.u32 %s373, 1
          %s1643 = smul.addr %s1642, 8
          %s1644 = scalar_lea.vmem [#allocation7], %s1643
          %1645 = dma.done %s1641, 128
        $region92: #{tpu_custom_call.1} parent=87 // pred_fallthru
          _
      $region88: #{tpu_custom_call.1} parent=5 // pred_fallthru
        _
    $region6: #{tpu_custom_call.1} parent=1 // loop_footer
      %s28 = sadd.s32 1, %s24
    $region7: #{tpu_custom_call.1} parent=1 // loop_footer_branch
      %23 = sbr.rel target = $region3
    $region8: #{tpu_custom_call.1} parent=1 // loop_exit
      _
    %1646 = vsyncpa [#allocation5], 1
    %s1647 = scalar_lea.sflag [#allocation5], 1
    %1648 = vsyncpa %s1647, 1
    %1649 = vsyncpa [#allocation6], 1
    %s1650 = scalar_lea.sflag [#allocation6], 1
    %1651 = vsyncpa %s1650, 1

</llo_original>
